<compile_context>
chip_gen: v7x
topology: tpu7x:2x2x1
jax: 0.10.0
libtpu: 0.0.40
codegen_flags: <defaults>
</compile_context>

<pallas_src>
import jax
import jax.numpy as jnp
from jax.experimental import pallas as pl
from jax.experimental.pallas import tpu as pltpu

TILE_B = 512   # batch tile: multiple of 128, small VMEM footprint


def fraud_nn_kernel(x_ref, w1_ref, b1_ref, w2_ref, b2_ref, w3_ref, b3_ref, o_ref):
    # fc1 + ReLU   (bf16 MXU matmul, f32 accumulate, f32 elementwise)
    h1 = jnp.dot(x_ref[...], w1_ref[...], preferred_element_type=jnp.float32)
    h1 = jnp.maximum(h1 + b1_ref[...], 0.0)

    # fc2 + ReLU
    h2 = jnp.dot(h1.astype(jnp.bfloat16), w2_ref[...],
                 preferred_element_type=jnp.float32)
    h2 = jnp.maximum(h2 + b2_ref[...], 0.0)

    # fc3 (out_features == 1): keep it off the MXU — VPU multiply + XLU
    # cross-lane reduce. w3 is stored as a (1, 32) f32 row and broadcasts.
    z = jnp.sum(h2 * w3_ref[...], axis=-1, keepdims=True) + b3_ref[...]  # (TILE_B, 1)

    # Sigmoid: exp on the EUP, approximate reciprocal on the EUP (free slot).
    o_ref[...] = pl.reciprocal(1.0 + jnp.exp(-z), approx=True)


def fraud_nn_forward(x, params, *, tile_b=TILE_B):
    """x: (B, input_dim) float array. Returns (B, 1) float32 probabilities."""
    w1, b1, w2, b2, w3, b3 = params
    B, D = x.shape

    # bf16 activations for the MXU (halves HBM bytes for the dominant input).
    x = x.astype(jnp.bfloat16)

    # Pad batch to a multiple of the tile (padded rows are discarded at the end).
    n_tiles = pl.cdiv(B, tile_b)
    b_pad = n_tiles * tile_b
    if b_pad != B:
        x = jnp.pad(x, ((0, b_pad - B), (0, 0)))

    const2d = lambda i: (0, 0)   # weights/biases: same block every step -> resident

    out_padded = pl.pallas_call(
        fraud_nn_kernel,
        out_shape=jax.ShapeDtypeStruct((b_pad, 1), jnp.float32),
        grid_spec=pltpu.PrefetchScalarGridSpec(
            num_scalar_prefetch=0,
            grid=(n_tiles,),
            in_specs=[
                pl.BlockSpec((tile_b, D), lambda i: (i, 0)),   # x: batch-tiled
                pl.BlockSpec(w1.shape, const2d),
                pl.BlockSpec(b1.shape, const2d),
                pl.BlockSpec(w2.shape, const2d),
                pl.BlockSpec(b2.shape, const2d),
                pl.BlockSpec(w3.shape, const2d),
                pl.BlockSpec(b3.shape, const2d),
            ],
            out_specs=pl.BlockSpec((tile_b, 1), lambda i: (i, 0)),
        ),
        compiler_params=pltpu.CompilerParams(
            dimension_semantics=("parallel",),   # shard batch across TCs on v7x
        ),
    )(x, w1, b1, w2, b2, w3, b3)

    # Drop batch padding.
    return out_padded[:B]


def init_params(key, input_dim):
    """Mimics nn.Linear's U(-1/sqrt(fan_in), 1/sqrt(fan_in)) init.

    Weights of fc1/fc2 are stored [in, out] in bf16 (MXU inputs); fc3's weight
    is stored as a (1, 32) f32 row for the VPU/XLU path; biases are f32 rows.
    """
    dims = [(input_dim, 64), (64, 32), (32, 1)]
    keys = jax.random.split(key, 2 * len(dims))
    raw = []
    for i, (fan_in, fan_out) in enumerate(dims):
        bound = 1.0 / (fan_in ** 0.5)
        w = jax.random.uniform(keys[2 * i], (fan_in, fan_out),
                               minval=-bound, maxval=bound, dtype=jnp.float32)
        b = jax.random.uniform(keys[2 * i + 1], (1, fan_out),
                               minval=-bound, maxval=bound, dtype=jnp.float32)
        raw += [w, b]
    w1, b1, w2, b2, w3, b3 = raw
    return (w1.astype(jnp.bfloat16), b1,
            w2.astype(jnp.bfloat16), b2,
            w3.reshape(1, 32), b3.reshape(1, 1))


if __name__ == "__main__":
    key = jax.random.PRNGKey(0)
    k_x, k_p = jax.random.split(key)

    batch, input_dim = 8, 32
    x = jax.random.normal(k_x, (batch, input_dim), dtype=jnp.float32)
    params = init_params(k_p, input_dim)

    out = fraud_nn_forward(x, params)
    jax.block_until_ready(out)
    assert out.shape == (batch, 1)

    # Reference 1: same bf16-matmul semantics as the kernel (tight tolerance).
    w1, b1, w2, b2, w3, b3 = params
    xb = x.astype(jnp.bfloat16)
    h1 = jnp.maximum(jnp.dot(xb, w1, preferred_element_type=jnp.float32) + b1, 0.0)
    h2 = jnp.maximum(jnp.dot(h1.astype(jnp.bfloat16), w2,
                             preferred_element_type=jnp.float32) + b2, 0.0)
    ref_bf16 = jax.nn.sigmoid(jnp.sum(h2 * w3, axis=-1, keepdims=True) + b3)
    assert jnp.allclose(out, ref_bf16, atol=5e-3, rtol=0.0)

    # Reference 2: full-f32 semantics of the original PyTorch module (loose tol).
    w1f, w2f = w1.astype(jnp.float32), w2.astype(jnp.float32)
    h1f = jnp.maximum(x @ w1f + b1, 0.0)
    h2f = jnp.maximum(h1f @ w2f + b2, 0.0)
    ref_f32 = jax.nn.sigmoid(jnp.sum(h2f * w3, axis=-1, keepdims=True) + b3)
    assert jnp.allclose(out, ref_f32, atol=5e-2, rtol=0.0)

    print("KERNEL_OK")
</pallas_src>

<mosaic_0001>
module attributes {stable_mosaic.version = 11 : i64} {
  func.func @fraud_nn_kernel(%arg0: i32, %arg1: memref<512x32xbf16, #tpu.memory_space<vmem>>, %arg2: memref<32x64xbf16, #tpu.memory_space<vmem>>, %arg3: memref<1x64xf32, #tpu.memory_space<vmem>>, %arg4: memref<64x32xbf16, #tpu.memory_space<vmem>>, %arg5: memref<1x32xf32, #tpu.memory_space<vmem>>, %arg6: memref<1x32xf32, #tpu.memory_space<vmem>>, %arg7: memref<1x1xf32, #tpu.memory_space<vmem>>, %arg8: memref<512x1xf32, #tpu.memory_space<vmem>>) attributes {dimension_semantics = [#tpu.dimension_semantics<parallel>], iteration_bounds = array<i64: 1>, scalar_prefetch = 0 : i64, scratch_operands = 0 : i64, tpu.core_type = #tpu.core_type<tc>, window_params = [{transform_indices = @transform_0, window_bounds = array<i64: 512, 32>}, {pipeline_mode = #tpu.pipeline_mode<synchronous>, transform_indices = @transform_1, window_bounds = array<i64: 32, 64>}, {pipeline_mode = #tpu.pipeline_mode<synchronous>, transform_indices = @transform_2, window_bounds = array<i64: 1, 64>}, {pipeline_mode = #tpu.pipeline_mode<synchronous>, transform_indices = @transform_3, window_bounds = array<i64: 64, 32>}, {pipeline_mode = #tpu.pipeline_mode<synchronous>, transform_indices = @transform_4, window_bounds = array<i64: 1, 32>}, {pipeline_mode = #tpu.pipeline_mode<synchronous>, transform_indices = @transform_5, window_bounds = array<i64: 1, 32>}, {pipeline_mode = #tpu.pipeline_mode<synchronous>, transform_indices = @transform_6, window_bounds = array<i64: 1, 1>}, {transform_indices = @transform_7, window_bounds = array<i64: 512, 1>}]} {
    %c0 = arith.constant 0 : index
    %c0_0 = arith.constant 0 : index
    %0 = vector.load %arg1[%c0, %c0_0] : memref<512x32xbf16, #tpu.memory_space<vmem>>, vector<512x32xbf16>
    %c0_1 = arith.constant 0 : index
    %c0_2 = arith.constant 0 : index
    %1 = vector.load %arg2[%c0_1, %c0_2] : memref<32x64xbf16, #tpu.memory_space<vmem>>, vector<32x64xbf16>
    %cst = arith.constant dense<0.000000e+00> : vector<512x64xf32>
    %2 = tpu.matmul %0, %1, %cst {dimension_numbers = #tpu.dot_dimension_numbers<[1], [0], [0], [1], [0, 0, 1, 1], [], []>} : vector<512x32xbf16>, vector<32x64xbf16>, vector<512x64xf32> -> vector<512x64xf32>
    %c0_3 = arith.constant 0 : index
    %c0_4 = arith.constant 0 : index
    %3 = vector.load %arg3[%c0_3, %c0_4] : memref<1x64xf32, #tpu.memory_space<vmem>>, vector<1x64xf32>
    %4 = vector.broadcast %3 : vector<1x64xf32> to vector<512x64xf32>
    %5 = arith.addf %2, %4 : vector<512x64xf32>
    %cst_5 = arith.constant 0.000000e+00 : f32
    %6 = vector.broadcast %cst_5 : f32 to vector<512x64xf32>
    %7 = arith.maximumf %5, %6 : vector<512x64xf32>
    %8 = arith.truncf %7 : vector<512x64xf32> to vector<512x64xbf16>
    %c0_6 = arith.constant 0 : index
    %c0_7 = arith.constant 0 : index
    %9 = vector.load %arg4[%c0_6, %c0_7] : memref<64x32xbf16, #tpu.memory_space<vmem>>, vector<64x32xbf16>
    %cst_8 = arith.constant dense<0.000000e+00> : vector<512x32xf32>
    %10 = tpu.matmul %8, %9, %cst_8 {dimension_numbers = #tpu.dot_dimension_numbers<[1], [0], [0], [1], [0, 0, 1, 1], [], []>} : vector<512x64xbf16>, vector<64x32xbf16>, vector<512x32xf32> -> vector<512x32xf32>
    %c0_9 = arith.constant 0 : index
    %c0_10 = arith.constant 0 : index
    %11 = vector.load %arg5[%c0_9, %c0_10] : memref<1x32xf32, #tpu.memory_space<vmem>>, vector<1x32xf32>
    %12 = vector.broadcast %11 : vector<1x32xf32> to vector<512x32xf32>
    %13 = arith.addf %10, %12 : vector<512x32xf32>
    %cst_11 = arith.constant 0.000000e+00 : f32
    %14 = vector.broadcast %cst_11 : f32 to vector<512x32xf32>
    %15 = arith.maximumf %13, %14 : vector<512x32xf32>
    %c0_12 = arith.constant 0 : index
    %c0_13 = arith.constant 0 : index
    %16 = vector.load %arg6[%c0_12, %c0_13] : memref<1x32xf32, #tpu.memory_space<vmem>>, vector<1x32xf32>
    %17 = vector.broadcast %16 : vector<1x32xf32> to vector<512x32xf32>
    %18 = arith.mulf %15, %17 : vector<512x32xf32>
    %cst_14 = arith.constant dense<0.000000e+00> : vector<512xf32>
    %19 = vector.multi_reduction <add>, %18, %cst_14 [1] : vector<512x32xf32> to vector<512xf32>
    %20 = vector.shape_cast %19 : vector<512xf32> to vector<512x1xf32>
    %c0_15 = arith.constant 0 : index
    %c0_16 = arith.constant 0 : index
    %21 = vector.load %arg7[%c0_15, %c0_16] : memref<1x1xf32, #tpu.memory_space<vmem>>, vector<1x1xf32>
    %22 = vector.broadcast %21 : vector<1x1xf32> to vector<512x1xf32>
    %23 = arith.addf %20, %22 : vector<512x1xf32>
    %cst_17 = arith.constant 0.000000e+00 : f32
    %24 = vector.broadcast %cst_17 : f32 to vector<512x1xf32>
    %25 = arith.subf %24, %23 : vector<512x1xf32>
    %26 = math.exp %25 : vector<512x1xf32>
    %cst_18 = arith.constant 1.000000e+00 : f32
    %27 = vector.broadcast %cst_18 : f32 to vector<512x1xf32>
    %28 = arith.addf %27, %26 : vector<512x1xf32>
    %29 = tpu.reciprocal %28 {approx = true} : vector<512x1xf32> -> vector<512x1xf32>
    %c0_19 = arith.constant 0 : index
    %c0_20 = arith.constant 0 : index
    %30 = vector.load %arg8[%c0_19, %c0_20] : memref<512x1xf32, #tpu.memory_space<vmem>>, vector<512x1xf32>
    tpu.vector_store %arg8[%c0_19, %c0_20], %29 {strides = array<i32>} : memref<512x1xf32, #tpu.memory_space<vmem>>, vector<512x1xf32>,
    return
  }
  func.func @transform_0(%arg0: i32) -> (i32, i32) {
    %c0_i32 = arith.constant 0 : i32
    %c0_i32_0 = arith.constant 0 : i32
    return %arg0, %c0_i32 : i32, i32
  }
  func.func @transform_1(%arg0: i32) -> (i32, i32) {
    %c0_i32 = arith.constant 0 : i32
    %c0_i32_0 = arith.constant 0 : i32
    %c0_i32_1 = arith.constant 0 : i32
    return %c0_i32, %c0_i32_0 : i32, i32
  }
  func.func @transform_2(%arg0: i32) -> (i32, i32) {
    %c0_i32 = arith.constant 0 : i32
    %c0_i32_0 = arith.constant 0 : i32
    %c0_i32_1 = arith.constant 0 : i32
    return %c0_i32, %c0_i32_0 : i32, i32
  }
  func.func @transform_3(%arg0: i32) -> (i32, i32) {
    %c0_i32 = arith.constant 0 : i32
    %c0_i32_0 = arith.constant 0 : i32
    %c0_i32_1 = arith.constant 0 : i32
    return %c0_i32, %c0_i32_0 : i32, i32
  }
  func.func @transform_4(%arg0: i32) -> (i32, i32) {
    %c0_i32 = arith.constant 0 : i32
    %c0_i32_0 = arith.constant 0 : i32
    %c0_i32_1 = arith.constant 0 : i32
    return %c0_i32, %c0_i32_0 : i32, i32
  }
  func.func @transform_5(%arg0: i32) -> (i32, i32) {
    %c0_i32 = arith.constant 0 : i32
    %c0_i32_0 = arith.constant 0 : i32
    %c0_i32_1 = arith.constant 0 : i32
    return %c0_i32, %c0_i32_0 : i32, i32
  }
  func.func @transform_6(%arg0: i32) -> (i32, i32) {
    %c0_i32 = arith.constant 0 : i32
    %c0_i32_0 = arith.constant 0 : i32
    %c0_i32_1 = arith.constant 0 : i32
    return %c0_i32, %c0_i32_0 : i32, i32
  }
  func.func @transform_7(%arg0: i32) -> (i32, i32) {
    %c0_i32 = arith.constant 0 : i32
    %c0_i32_0 = arith.constant 0 : i32
    return %arg0, %c0_i32 : i32, i32
  }
}

</mosaic_0001>

<llo_original>
// kernel: tpu_custom_call.1
$region0: #{tpu_custom_call.1}
  #allocation0 [shape = 'u32[]', space=smem, size = 0x4, offset = 0x4, fixed_abs, tag = 'smem constant byte address 0x4 - core index']
  #allocation1 [shape = 'u32[144,128]{1,0:T(1,128)}', space=vmem, size = 0x12000, scoped, tag = 'internal scratch']
  #allocation2 [shape = 'f32[1,1]{1,0:T(1,128)S(1)}', space=vmem, size = 0x200, scoped, tag = 'scoped memory for tpu_custom_call.1']
  %s0 = inlined_call_operand.vmem [shape: bf16[512,32], index: 0, kind: input, shape index: {}]
  %s1 = inlined_call_operand.vmem [shape: bf16[32,64], index: 1, kind: input, shape index: {}]
  %s2 = inlined_call_operand.vmem [shape: f32[1,64], index: 2, kind: input, shape index: {}]
  %s3 = inlined_call_operand.vmem [shape: bf16[64,32], index: 3, kind: input, shape index: {}]
  %s4 = inlined_call_operand.vmem [shape: f32[1,32], index: 4, kind: input, shape index: {}]
  %s5 = inlined_call_operand.vmem [shape: f32[1,32], index: 5, kind: input, shape index: {}]
  %s6 = inlined_call_operand.<no memory space> [shape: f32[1,1], index: 6, kind: input, shape index: {}]
  %s7 = inlined_call_operand.vmem [shape: f32[512,1], index: 7, kind: output, shape index: {}]
  %s8 = sld [smem:[#allocation0]]
  $region38: #{tpu_custom_call.1} parent=0
    _
  %s10 = ssub.s32 1, %s8
  %s11 = scalar_select 0, %s10, %s8
  %v12 = vstv %s6
  %13 = vst [vmem:[#allocation2] sm:$0x1] %v12
  // Predicated region
  $region2: #{tpu_custom_call.1} parent=0 // pred_check
    _
  $region3: #{tpu_custom_call.1} parent=0 // pred_check_branch
    %15 = sbr.rel (0) target = $region5
  $region4: #{tpu_custom_call.1} parent=0 // pred_region
    _
  $region5: #{tpu_custom_call.1} parent=0 // pred_fallthru
    _
  // Predicated region
  $region6: #{tpu_custom_call.1} parent=0 // pred_check
    _
  $region7: #{tpu_custom_call.1} parent=0 // pred_check_branch
    %17 = sbr.rel (0) target = $region9
  $region8: #{tpu_custom_call.1} parent=0 // pred_region
    _
  $region9: #{tpu_custom_call.1} parent=0 // pred_fallthru
    _
  // Predicated region
  $region10: #{tpu_custom_call.1} parent=0 // pred_check
    _
  $region11: #{tpu_custom_call.1} parent=0 // pred_check_branch
    %19 = sbr.rel (0) target = $region13
  $region12: #{tpu_custom_call.1} parent=0 // pred_region
    _
  $region13: #{tpu_custom_call.1} parent=0 // pred_fallthru
    _
  // Predicated region
  $region14: #{tpu_custom_call.1} parent=0 // pred_check
    _
  $region15: #{tpu_custom_call.1} parent=0 // pred_check_branch
    %21 = sbr.rel (0) target = $region17
  $region16: #{tpu_custom_call.1} parent=0 // pred_region
    _
  $region17: #{tpu_custom_call.1} parent=0 // pred_fallthru
    _
  // Predicated region
  $region18: #{tpu_custom_call.1} parent=0 // pred_check
    _
  $region19: #{tpu_custom_call.1} parent=0 // pred_check_branch
    %23 = sbr.rel (0) target = $region21
  $region20: #{tpu_custom_call.1} parent=0 // pred_region
    _
  $region21: #{tpu_custom_call.1} parent=0 // pred_fallthru
    _
  // Predicated region
  $region22: #{tpu_custom_call.1} parent=0 // pred_check
    _
  $region23: #{tpu_custom_call.1} parent=0 // pred_check_branch
    %25 = sbr.rel (0) target = $region25
  $region24: #{tpu_custom_call.1} parent=0 // pred_region
    _
  $region25: #{tpu_custom_call.1} parent=0 // pred_fallthru
    _
  // Predicated region
  $region26: #{tpu_custom_call.1} parent=0 // pred_check
    _
  $region27: #{tpu_custom_call.1} parent=0 // pred_check_branch
    %27 = sbr.rel (0) target = $region29
  $region28: #{tpu_custom_call.1} parent=0 // pred_region
    _
  $region29: #{tpu_custom_call.1} parent=0 // pred_fallthru
    _
  %v29 = vld [vmem:[%s0] sm:$0xf]
  %v30 = vld [vmem:[%s0 + $0x4] sm:$0xf]
  %v31 = vld [vmem:[%s0 + $0x8] sm:$0xf]
  %v32 = vld [vmem:[%s0 + $0xc] sm:$0xf]
  %v33 = vld [vmem:[%s0 + $0x10] sm:$0xf]
  %v34 = vld [vmem:[%s0 + $0x14] sm:$0xf]
  %v35 = vld [vmem:[%s0 + $0x18] sm:$0xf]
  %v36 = vld [vmem:[%s0 + $0x1c] sm:$0xf]
  %v37 = vld [vmem:[%s0 + $0x20] sm:$0xf]
  %v38 = vld [vmem:[%s0 + $0x24] sm:$0xf]
  %v39 = vld [vmem:[%s0 + $0x28] sm:$0xf]
  %v40 = vld [vmem:[%s0 + $0x2c] sm:$0xf]
  %v41 = vld [vmem:[%s0 + $0x30] sm:$0xf]
  %v42 = vld [vmem:[%s0 + $0x34] sm:$0xf]
  %v43 = vld [vmem:[%s0 + $0x38] sm:$0xf]
  %v44 = vld [vmem:[%s0 + $0x3c] sm:$0xf]
  %v45 = vld [vmem:[%s0 + $0x40] sm:$0xf]
  %v46 = vld [vmem:[%s0 + $0x44] sm:$0xf]
  %v47 = vld [vmem:[%s0 + $0x48] sm:$0xf]
  %v48 = vld [vmem:[%s0 + $0x4c] sm:$0xf]
  %v49 = vld [vmem:[%s0 + $0x50] sm:$0xf]
  %v50 = vld [vmem:[%s0 + $0x54] sm:$0xf]
  %v51 = vld [vmem:[%s0 + $0x58] sm:$0xf]
  %v52 = vld [vmem:[%s0 + $0x5c] sm:$0xf]
  %v53 = vld [vmem:[%s0 + $0x60] sm:$0xf]
  %v54 = vld [vmem:[%s0 + $0x64] sm:$0xf]
  %v55 = vld [vmem:[%s0 + $0x68] sm:$0xf]
  %v56 = vld [vmem:[%s0 + $0x6c] sm:$0xf]
  %v57 = vld [vmem:[%s0 + $0x70] sm:$0xf]
  %v58 = vld [vmem:[%s0 + $0x74] sm:$0xf]
  %v59 = vld [vmem:[%s0 + $0x78] sm:$0xf]
  %v60 = vld [vmem:[%s0 + $0x7c] sm:$0xf]
  %v61 = vld [vmem:[%s0 + $0x80] sm:$0xf]
  %v62 = vld [vmem:[%s0 + $0x84] sm:$0xf]
  %v63 = vld [vmem:[%s0 + $0x88] sm:$0xf]
  %v64 = vld [vmem:[%s0 + $0x8c] sm:$0xf]
  %v65 = vld [vmem:[%s0 + $0x90] sm:$0xf]
  %v66 = vld [vmem:[%s0 + $0x94] sm:$0xf]
  %v67 = vld [vmem:[%s0 + $0x98] sm:$0xf]
  %v68 = vld [vmem:[%s0 + $0x9c] sm:$0xf]
  %v69 = vld [vmem:[%s0 + $0xa0] sm:$0xf]
  %v70 = vld [vmem:[%s0 + $0xa4] sm:$0xf]
  %v71 = vld [vmem:[%s0 + $0xa8] sm:$0xf]
  %v72 = vld [vmem:[%s0 + $0xac] sm:$0xf]
  %v73 = vld [vmem:[%s0 + $0xb0] sm:$0xf]
  %v74 = vld [vmem:[%s0 + $0xb4] sm:$0xf]
  %v75 = vld [vmem:[%s0 + $0xb8] sm:$0xf]
  %v76 = vld [vmem:[%s0 + $0xbc] sm:$0xf]
  %v77 = vld [vmem:[%s0 + $0xc0] sm:$0xf]
  %v78 = vld [vmem:[%s0 + $0xc4] sm:$0xf]
  %v79 = vld [vmem:[%s0 + $0xc8] sm:$0xf]
  %v80 = vld [vmem:[%s0 + $0xcc] sm:$0xf]
  %v81 = vld [vmem:[%s0 + $0xd0] sm:$0xf]
  %v82 = vld [vmem:[%s0 + $0xd4] sm:$0xf]
  %v83 = vld [vmem:[%s0 + $0xd8] sm:$0xf]
  %v84 = vld [vmem:[%s0 + $0xdc] sm:$0xf]
  %v85 = vld [vmem:[%s0 + $0xe0] sm:$0xf]
  %v86 = vld [vmem:[%s0 + $0xe4] sm:$0xf]
  %v87 = vld [vmem:[%s0 + $0xe8] sm:$0xf]
  %v88 = vld [vmem:[%s0 + $0xec] sm:$0xf]
  %v89 = vld [vmem:[%s0 + $0xf0] sm:$0xf]
  %v90 = vld [vmem:[%s0 + $0xf4] sm:$0xf]
  %v91 = vld [vmem:[%s0 + $0xf8] sm:$0xf]
  %v92 = vld [vmem:[%s0 + $0xfc] sm:$0xf]
  %v93 = vld [vmem:[%s1] sm:$0xf]
  %v94 = vld [vmem:[%s1 + $0x4] sm:$0xf]
  %v95 = vld [vmem:[%s1 + $0x8] sm:$0xf]
  %v96 = vld [vmem:[%s1 + $0xc] sm:$0xf]
  %v97 = vld [vmem:[%s2] sm:$0x1]
  %v99 = vlaneseq
  %v100 = vshrl.u32 %v99, 7
  %v101 = vsub.s32 0, %v100
  %v102 = vrot.slane %v97, %v101
  %v168 = vunpack.c.l.b16 %v29
  %v169 = vunpack.c.l.b16 %v30
  %v170 = vunpack.c.l.b16 %v31
  %v171 = vunpack.c.l.b16 %v32
  %v172 = vunpack.c.l.b16 %v33
  %v173 = vunpack.c.l.b16 %v34
  %v174 = vunpack.c.l.b16 %v35
  %v175 = vunpack.c.l.b16 %v36
  %v176 = vunpack.c.l.b16 %v37
  %v177 = vunpack.c.l.b16 %v38
  %v178 = vunpack.c.l.b16 %v39
  %v179 = vunpack.c.l.b16 %v40
  %v180 = vunpack.c.l.b16 %v41
  %v181 = vunpack.c.l.b16 %v42
  %v182 = vunpack.c.l.b16 %v43
  %v183 = vunpack.c.l.b16 %v44
  %v184 = vunpack.c.l.b16 %v45
  %v185 = vunpack.c.l.b16 %v46
  %v186 = vunpack.c.l.b16 %v47
  %v187 = vunpack.c.l.b16 %v48
  %v188 = vunpack.c.l.b16 %v49
  %v189 = vunpack.c.l.b16 %v50
  %v190 = vunpack.c.l.b16 %v51
  %v191 = vunpack.c.l.b16 %v52
  %v192 = vunpack.c.l.b16 %v53
  %v193 = vunpack.c.l.b16 %v54
  %v194 = vunpack.c.l.b16 %v55
  %v195 = vunpack.c.l.b16 %v56
  %v196 = vunpack.c.l.b16 %v57
  %v197 = vunpack.c.l.b16 %v58
  %v198 = vunpack.c.l.b16 %v59
  %v199 = vunpack.c.l.b16 %v60
  %v200 = vunpack.c.l.b16 %v61
  %v201 = vunpack.c.l.b16 %v62
  %v202 = vunpack.c.l.b16 %v63
  %v203 = vunpack.c.l.b16 %v64
  %v204 = vunpack.c.l.b16 %v65
  %v205 = vunpack.c.l.b16 %v66
  %v206 = vunpack.c.l.b16 %v67
  %v207 = vunpack.c.l.b16 %v68
  %v208 = vunpack.c.l.b16 %v69
  %v209 = vunpack.c.l.b16 %v70
  %v210 = vunpack.c.l.b16 %v71
  %v211 = vunpack.c.l.b16 %v72
  %v212 = vunpack.c.l.b16 %v73
  %v213 = vunpack.c.l.b16 %v74
  %v214 = vunpack.c.l.b16 %v75
  %v215 = vunpack.c.l.b16 %v76
  %v216 = vunpack.c.l.b16 %v77
  %v217 = vunpack.c.l.b16 %v78
  %v218 = vunpack.c.l.b16 %v79
  %v219 = vunpack.c.l.b16 %v80
  %v220 = vunpack.c.l.b16 %v81
  %v221 = vunpack.c.l.b16 %v82
  %v222 = vunpack.c.l.b16 %v83
  %v223 = vunpack.c.l.b16 %v84
  %v224 = vunpack.c.l.b16 %v85
  %v225 = vunpack.c.l.b16 %v86
  %v226 = vunpack.c.l.b16 %v87
  %v227 = vunpack.c.l.b16 %v88
  %v228 = vunpack.c.l.b16 %v89
  %v229 = vunpack.c.l.b16 %v90
  %v230 = vunpack.c.l.b16 %v91
  %v231 = vunpack.c.l.b16 %v92
  %v232 = vpack.c.b16 %v169, %v168
  %v233 = vpack.c.b16 %v171, %v170
  %v234 = vpack.c.b16 %v173, %v172
  %v235 = vpack.c.b16 %v175, %v174
  %v236 = vpack.c.b16 %v177, %v176
  %v237 = vpack.c.b16 %v179, %v178
  %v238 = vpack.c.b16 %v181, %v180
  %v239 = vpack.c.b16 %v183, %v182
  %v240 = vpack.c.b16 %v185, %v184
  %v241 = vpack.c.b16 %v187, %v186
  %v242 = vpack.c.b16 %v189, %v188
  %v243 = vpack.c.b16 %v191, %v190
  %v244 = vpack.c.b16 %v193, %v192
  %v245 = vpack.c.b16 %v195, %v194
  %v246 = vpack.c.b16 %v197, %v196
  %v247 = vpack.c.b16 %v199, %v198
  %v248 = vpack.c.b16 %v201, %v200
  %v249 = vpack.c.b16 %v203, %v202
  %v250 = vpack.c.b16 %v205, %v204
  %v251 = vpack.c.b16 %v207, %v206
  %v252 = vpack.c.b16 %v209, %v208
  %v253 = vpack.c.b16 %v211, %v210
  %v254 = vpack.c.b16 %v213, %v212
  %v255 = vpack.c.b16 %v215, %v214
  %v256 = vpack.c.b16 %v217, %v216
  %v257 = vpack.c.b16 %v219, %v218
  %v258 = vpack.c.b16 %v221, %v220
  %v259 = vpack.c.b16 %v223, %v222
  %v260 = vpack.c.b16 %v225, %v224
  %v261 = vpack.c.b16 %v227, %v226
  %v262 = vpack.c.b16 %v229, %v228
  %v263 = vpack.c.b16 %v231, %v230
  %v268 = vunpack.c.l.b16 %v93
  %v269 = vunpack.c.l.b16 %v94
  %v270 = vunpack.c.l.b16 %v95
  %v271 = vunpack.c.l.b16 %v96
  %v272 = vpack.c.b16 %v269, %v268
  %v273 = vpack.c.b16 %v271, %v270
  %vm276 = vcmask 261120
  %v278 = vsel %vm276, %v232, 0
  %v281 = vsel %vm276, %v233, 0
  %v284 = vsel %vm276, %v234, 0
  %v287 = vsel %vm276, %v235, 0
  %v290 = vsel %vm276, %v236, 0
  %v293 = vsel %vm276, %v237, 0
  %v296 = vsel %vm276, %v238, 0
  %v299 = vsel %vm276, %v239, 0
  %v302 = vsel %vm276, %v240, 0
  %v305 = vsel %vm276, %v241, 0
  %v308 = vsel %vm276, %v242, 0
  %v311 = vsel %vm276, %v243, 0
  %v314 = vsel %vm276, %v244, 0
  %v317 = vsel %vm276, %v245, 0
  %v320 = vsel %vm276, %v246, 0
  %v323 = vsel %vm276, %v247, 0
  %v326 = vsel %vm276, %v248, 0
  %v329 = vsel %vm276, %v249, 0
  %v332 = vsel %vm276, %v250, 0
  %v335 = vsel %vm276, %v251, 0
  %v338 = vsel %vm276, %v252, 0
  %v341 = vsel %vm276, %v253, 0
  %v344 = vsel %vm276, %v254, 0
  %v347 = vsel %vm276, %v255, 0
  %v350 = vsel %vm276, %v256, 0
  %v353 = vsel %vm276, %v257, 0
  %v356 = vsel %vm276, %v258, 0
  %v359 = vsel %vm276, %v259, 0
  %v362 = vsel %vm276, %v260, 0
  %v365 = vsel %vm276, %v261, 0
  %v368 = vsel %vm276, %v262, 0
  %v371 = vsel %vm276, %v263, 0
  %373 = vmatprep.subr.bf16.mxu0 0
  %374 = vmatpush1.bf16.msra.mxu0 %v272
  %375 = vmatprep.subr.bf16.mxu0 0
  %376 = vmatpush1.bf16.msra.mxu0 %v273
  %377 = vmatprep.subr.bf16.mxu0 0
  %378 = vmatpush1.bf16.msra.mxu0 0
  %379 = vmatprep.subr.bf16.mxu0 0
  %380 = vmatpush1.bf16.msra.mxu0 0
  %381 = vmatprep.subr.bf16.mxu0 0
  %382 = vmatpush1.bf16.msra.mxu0 0
  %383 = vmatprep.subr.bf16.mxu0 0
  %384 = vmatpush1.bf16.msra.mxu0 0
  %385 = vmatprep.subr.bf16.mxu0 0
  %386 = vmatpush1.bf16.msra.mxu0 0
  %387 = vmatprep.subr.bf16.mxu0 0
  %388 = vmatpush1.bf16.msra.mxu0 0
  %389 = vmatprep.subr.bf16.mxu0 0
  %390 = vmatpush1.bf16.msra.mxu0 0
  %391 = vmatprep.subr.bf16.mxu0 0
  %392 = vmatpush1.bf16.msra.mxu0 0
  %393 = vmatprep.subr.bf16.mxu0 0
  %394 = vmatpush1.bf16.msra.mxu0 0
  %395 = vmatprep.subr.bf16.mxu0 0
  %396 = vmatpush1.bf16.msra.mxu0 0
  %397 = vmatprep.subr.bf16.mxu0 0
  %398 = vmatpush1.bf16.msra.mxu0 0
  %399 = vmatprep.subr.bf16.mxu0 0
  %400 = vmatpush1.bf16.msra.mxu0 0
  %401 = vmatprep.subr.bf16.mxu0 0
  %402 = vmatpush1.bf16.msra.mxu0 0
  %403 = vmatprep.subr.bf16.mxu0 0
  %404 = vmatpush1.bf16.msra.mxu0 0
  %405 = vmatprep.mubr.bf16.mxu0 0
  %406 = vmatmul.mubr.bf16.gmra.mrb[0].mxu0 %v278
  %v407 = vpop.f32.mrb[0].mxu0
  %v408 = vadd.f32 %v102, %v407
  %v409 = vpop.f32.mrb[0].mxu0
  %v410 = vpop.f32.mrb[0].mxu0
  %v411 = vadd.f32 %v102, %v410
  %v412 = vpop.f32.mrb[0].mxu0
  %413 = vmatprep.mubr.bf16.mxu0 0
  %414 = vmatmul.mubr.bf16.gmra.mrb[0].mxu0 %v281
  %v415 = vpop.f32.mrb[0].mxu0
  %v416 = vadd.f32 %v102, %v415
  %v417 = vpop.f32.mrb[0].mxu0
  %v418 = vpop.f32.mrb[0].mxu0
  %v419 = vadd.f32 %v102, %v418
  %v420 = vpop.f32.mrb[0].mxu0
  %421 = vmatprep.mubr.bf16.mxu0 0
  %422 = vmatmul.mubr.bf16.gmra.mrb[0].mxu0 %v284
  %v423 = vpop.f32.mrb[0].mxu0
  %v424 = vadd.f32 %v102, %v423
  %v425 = vpop.f32.mrb[0].mxu0
  %v426 = vpop.f32.mrb[0].mxu0
  %v427 = vadd.f32 %v102, %v426
  %v428 = vpop.f32.mrb[0].mxu0
  %429 = vmatprep.mubr.bf16.mxu0 0
  %430 = vmatmul.mubr.bf16.gmra.mrb[0].mxu0 %v287
  %v431 = vpop.f32.mrb[0].mxu0
  %v432 = vadd.f32 %v102, %v431
  %v433 = vpop.f32.mrb[0].mxu0
  %v434 = vpop.f32.mrb[0].mxu0
  %v435 = vadd.f32 %v102, %v434
  %v436 = vpop.f32.mrb[0].mxu0
  %437 = vmatprep.mubr.bf16.mxu0 0
  %438 = vmatmul.mubr.bf16.gmra.mrb[0].mxu0 %v290
  %v439 = vpop.f32.mrb[0].mxu0
  %v440 = vadd.f32 %v102, %v439
  %v441 = vpop.f32.mrb[0].mxu0
  %v442 = vpop.f32.mrb[0].mxu0
  %v443 = vadd.f32 %v102, %v442
  %v444 = vpop.f32.mrb[0].mxu0
  %445 = vmatprep.mubr.bf16.mxu0 0
  %446 = vmatmul.mubr.bf16.gmra.mrb[0].mxu0 %v293
  %v447 = vpop.f32.mrb[0].mxu0
  %v448 = vadd.f32 %v102, %v447
  %v449 = vpop.f32.mrb[0].mxu0
  %v450 = vpop.f32.mrb[0].mxu0
  %v451 = vadd.f32 %v102, %v450
  %v452 = vpop.f32.mrb[0].mxu0
  %453 = vmatprep.mubr.bf16.mxu0 0
  %454 = vmatmul.mubr.bf16.gmra.mrb[0].mxu0 %v296
  %v455 = vpop.f32.mrb[0].mxu0
  %v456 = vadd.f32 %v102, %v455
  %v457 = vpop.f32.mrb[0].mxu0
  %v458 = vpop.f32.mrb[0].mxu0
  %v459 = vadd.f32 %v102, %v458
  %v460 = vpop.f32.mrb[0].mxu0
  %461 = vmatprep.mubr.bf16.mxu0 0
  %462 = vmatmul.mubr.bf16.gmra.mrb[0].mxu0 %v299
  %v463 = vpop.f32.mrb[0].mxu0
  %v464 = vadd.f32 %v102, %v463
  %v465 = vpop.f32.mrb[0].mxu0
  %v466 = vpop.f32.mrb[0].mxu0
  %v467 = vadd.f32 %v102, %v466
  %v468 = vpop.f32.mrb[0].mxu0
  %469 = vmatprep.mubr.bf16.mxu0 0
  %470 = vmatmul.mubr.bf16.gmra.mrb[0].mxu0 %v302
  %v471 = vpop.f32.mrb[0].mxu0
  %v472 = vadd.f32 %v102, %v471
  %v473 = vpop.f32.mrb[0].mxu0
  %v474 = vpop.f32.mrb[0].mxu0
  %v475 = vadd.f32 %v102, %v474
  %v476 = vpop.f32.mrb[0].mxu0
  %477 = vmatprep.mubr.bf16.mxu0 0
  %478 = vmatmul.mubr.bf16.gmra.mrb[0].mxu0 %v305
  %v479 = vpop.f32.mrb[0].mxu0
  %v480 = vadd.f32 %v102, %v479
  %v481 = vpop.f32.mrb[0].mxu0
  %v482 = vpop.f32.mrb[0].mxu0
  %v483 = vadd.f32 %v102, %v482
  %v484 = vpop.f32.mrb[0].mxu0
  %485 = vmatprep.mubr.bf16.mxu0 0
  %486 = vmatmul.mubr.bf16.gmra.mrb[0].mxu0 %v308
  %v487 = vpop.f32.mrb[0].mxu0
  %v488 = vadd.f32 %v102, %v487
  %v489 = vpop.f32.mrb[0].mxu0
  %v490 = vpop.f32.mrb[0].mxu0
  %v491 = vadd.f32 %v102, %v490
  %v492 = vpop.f32.mrb[0].mxu0
  %493 = vmatprep.mubr.bf16.mxu0 0
  %494 = vmatmul.mubr.bf16.gmra.mrb[0].mxu0 %v311
  %v495 = vpop.f32.mrb[0].mxu0
  %v496 = vadd.f32 %v102, %v495
  %v497 = vpop.f32.mrb[0].mxu0
  %v498 = vpop.f32.mrb[0].mxu0
  %v499 = vadd.f32 %v102, %v498
  %v500 = vpop.f32.mrb[0].mxu0
  %501 = vmatprep.mubr.bf16.mxu0 0
  %502 = vmatmul.mubr.bf16.gmra.mrb[0].mxu0 %v314
  %v503 = vpop.f32.mrb[0].mxu0
  %v504 = vadd.f32 %v102, %v503
  %v505 = vpop.f32.mrb[0].mxu0
  %v506 = vpop.f32.mrb[0].mxu0
  %v507 = vadd.f32 %v102, %v506
  %v508 = vpop.f32.mrb[0].mxu0
  %509 = vmatprep.mubr.bf16.mxu0 0
  %510 = vmatmul.mubr.bf16.gmra.mrb[0].mxu0 %v317
  %v511 = vpop.f32.mrb[0].mxu0
  %v512 = vadd.f32 %v102, %v511
  %v513 = vpop.f32.mrb[0].mxu0
  %v514 = vpop.f32.mrb[0].mxu0
  %v515 = vadd.f32 %v102, %v514
  %v516 = vpop.f32.mrb[0].mxu0
  %517 = vmatprep.mubr.bf16.mxu0 0
  %518 = vmatmul.mubr.bf16.gmra.mrb[0].mxu0 %v320
  %v519 = vpop.f32.mrb[0].mxu0
  %v520 = vadd.f32 %v102, %v519
  %v521 = vpop.f32.mrb[0].mxu0
  %v522 = vpop.f32.mrb[0].mxu0
  %v523 = vadd.f32 %v102, %v522
  %v524 = vpop.f32.mrb[0].mxu0
  %525 = vmatprep.mubr.bf16.mxu0 0
  %526 = vmatmul.mubr.bf16.gmra.mrb[0].mxu0 %v323
  %v527 = vpop.f32.mrb[0].mxu0
  %v528 = vadd.f32 %v102, %v527
  %v529 = vpop.f32.mrb[0].mxu0
  %v530 = vpop.f32.mrb[0].mxu0
  %v531 = vadd.f32 %v102, %v530
  %v532 = vpop.f32.mrb[0].mxu0
  %533 = vmatprep.mubr.bf16.mxu0 0
  %534 = vmatmul.mubr.bf16.gmra.mrb[0].mxu0 %v326
  %v535 = vpop.f32.mrb[0].mxu0
  %v536 = vadd.f32 %v102, %v535
  %v537 = vpop.f32.mrb[0].mxu0
  %v538 = vpop.f32.mrb[0].mxu0
  %v539 = vadd.f32 %v102, %v538
  %v540 = vpop.f32.mrb[0].mxu0
  %541 = vmatprep.mubr.bf16.mxu0 0
  %542 = vmatmul.mubr.bf16.gmra.mrb[0].mxu0 %v329
  %v543 = vpop.f32.mrb[0].mxu0
  %v544 = vadd.f32 %v102, %v543
  %v545 = vpop.f32.mrb[0].mxu0
  %v546 = vpop.f32.mrb[0].mxu0
  %v547 = vadd.f32 %v102, %v546
  %v548 = vpop.f32.mrb[0].mxu0
  %549 = vmatprep.mubr.bf16.mxu0 0
  %550 = vmatmul.mubr.bf16.gmra.mrb[0].mxu0 %v332
  %v551 = vpop.f32.mrb[0].mxu0
  %v552 = vadd.f32 %v102, %v551
  %v553 = vpop.f32.mrb[0].mxu0
  %v554 = vpop.f32.mrb[0].mxu0
  %v555 = vadd.f32 %v102, %v554
  %v556 = vpop.f32.mrb[0].mxu0
  %557 = vmatprep.mubr.bf16.mxu0 0
  %558 = vmatmul.mubr.bf16.gmra.mrb[0].mxu0 %v335
  %v559 = vpop.f32.mrb[0].mxu0
  %v560 = vadd.f32 %v102, %v559
  %v561 = vpop.f32.mrb[0].mxu0
  %v562 = vpop.f32.mrb[0].mxu0
  %v563 = vadd.f32 %v102, %v562
  %v564 = vpop.f32.mrb[0].mxu0
  %565 = vmatprep.mubr.bf16.mxu0 0
  %566 = vmatmul.mubr.bf16.gmra.mrb[0].mxu0 %v338
  %v567 = vpop.f32.mrb[0].mxu0
  %v568 = vadd.f32 %v102, %v567
  %v569 = vpop.f32.mrb[0].mxu0
  %v570 = vpop.f32.mrb[0].mxu0
  %v571 = vadd.f32 %v102, %v570
  %v572 = vpop.f32.mrb[0].mxu0
  %573 = vmatprep.mubr.bf16.mxu0 0
  %574 = vmatmul.mubr.bf16.gmra.mrb[0].mxu0 %v341
  %v575 = vpop.f32.mrb[0].mxu0
  %v576 = vadd.f32 %v102, %v575
  %v577 = vpop.f32.mrb[0].mxu0
  %v578 = vpop.f32.mrb[0].mxu0
  %v579 = vadd.f32 %v102, %v578
  %v580 = vpop.f32.mrb[0].mxu0
  %581 = vmatprep.mubr.bf16.mxu0 0
  %582 = vmatmul.mubr.bf16.gmra.mrb[0].mxu0 %v344
  %v583 = vpop.f32.mrb[0].mxu0
  %v584 = vadd.f32 %v102, %v583
  %v585 = vpop.f32.mrb[0].mxu0
  %v586 = vpop.f32.mrb[0].mxu0
  %v587 = vadd.f32 %v102, %v586
  %v588 = vpop.f32.mrb[0].mxu0
  %589 = vmatprep.mubr.bf16.mxu0 0
  %590 = vmatmul.mubr.bf16.gmra.mrb[0].mxu0 %v347
  %v591 = vpop.f32.mrb[0].mxu0
  %v592 = vadd.f32 %v102, %v591
  %v593 = vpop.f32.mrb[0].mxu0
  %v594 = vpop.f32.mrb[0].mxu0
  %v595 = vadd.f32 %v102, %v594
  %v596 = vpop.f32.mrb[0].mxu0
  %597 = vmatprep.mubr.bf16.mxu0 0
  %598 = vmatmul.mubr.bf16.gmra.mrb[0].mxu0 %v350
  %v599 = vpop.f32.mrb[0].mxu0
  %v600 = vadd.f32 %v102, %v599
  %v601 = vpop.f32.mrb[0].mxu0
  %v602 = vpop.f32.mrb[0].mxu0
  %v603 = vadd.f32 %v102, %v602
  %v604 = vpop.f32.mrb[0].mxu0
  %605 = vmatprep.mubr.bf16.mxu0 0
  %606 = vmatmul.mubr.bf16.gmra.mrb[0].mxu0 %v353
  %v607 = vpop.f32.mrb[0].mxu0
  %v608 = vadd.f32 %v102, %v607
  %v609 = vpop.f32.mrb[0].mxu0
  %v610 = vpop.f32.mrb[0].mxu0
  %v611 = vadd.f32 %v102, %v610
  %v612 = vpop.f32.mrb[0].mxu0
  %613 = vmatprep.mubr.bf16.mxu0 0
  %614 = vmatmul.mubr.bf16.gmra.mrb[0].mxu0 %v356
  %v615 = vpop.f32.mrb[0].mxu0
  %v616 = vadd.f32 %v102, %v615
  %v617 = vpop.f32.mrb[0].mxu0
  %v618 = vpop.f32.mrb[0].mxu0
  %v619 = vadd.f32 %v102, %v618
  %v620 = vpop.f32.mrb[0].mxu0
  %621 = vmatprep.mubr.bf16.mxu0 0
  %622 = vmatmul.mubr.bf16.gmra.mrb[0].mxu0 %v359
  %v623 = vpop.f32.mrb[0].mxu0
  %v624 = vadd.f32 %v102, %v623
  %v625 = vpop.f32.mrb[0].mxu0
  %v626 = vpop.f32.mrb[0].mxu0
  %v627 = vadd.f32 %v102, %v626
  %v628 = vpop.f32.mrb[0].mxu0
  %629 = vmatprep.mubr.bf16.mxu0 0
  %630 = vmatmul.mubr.bf16.gmra.mrb[0].mxu0 %v362
  %v631 = vpop.f32.mrb[0].mxu0
  %v632 = vadd.f32 %v102, %v631
  %v633 = vpop.f32.mrb[0].mxu0
  %v634 = vpop.f32.mrb[0].mxu0
  %v635 = vadd.f32 %v102, %v634
  %v636 = vpop.f32.mrb[0].mxu0
  %637 = vmatprep.mubr.bf16.mxu0 0
  %638 = vmatmul.mubr.bf16.gmra.mrb[0].mxu0 %v365
  %v639 = vpop.f32.mrb[0].mxu0
  %v640 = vadd.f32 %v102, %v639
  %v641 = vpop.f32.mrb[0].mxu0
  %v642 = vpop.f32.mrb[0].mxu0
  %v643 = vadd.f32 %v102, %v642
  %v644 = vpop.f32.mrb[0].mxu0
  %645 = vmatprep.mubr.bf16.mxu0 0
  %646 = vmatmul.mubr.bf16.gmra.mrb[0].mxu0 %v368
  %v647 = vpop.f32.mrb[0].mxu0
  %v648 = vadd.f32 %v102, %v647
  %v649 = vpop.f32.mrb[0].mxu0
  %v650 = vpop.f32.mrb[0].mxu0
  %v651 = vadd.f32 %v102, %v650
  %v652 = vpop.f32.mrb[0].mxu0
  %653 = vmatprep.mubr.bf16.mxu0 0
  %654 = vmatmul.mubr.bf16.gmra.mrb[0].mxu0 %v371
  %v655 = vpop.f32.mrb[0].mxu0
  %v656 = vadd.f32 %v102, %v655
  %v657 = vpop.f32.mrb[0].mxu0
  %v658 = vpop.f32.mrb[0].mxu0
  %v659 = vadd.f32 %v102, %v658
  %v660 = vpop.f32.mrb[0].mxu0
  %661 = vdwg.mxu0
  %v662 = vmax.f32 %v408, 0.0
  %v663 = vmax.f32 %v411, 0.0
  %v664 = vmax.f32 %v416, 0.0
  %v665 = vmax.f32 %v419, 0.0
  %v666 = vmax.f32 %v424, 0.0
  %v667 = vmax.f32 %v427, 0.0
  %v668 = vmax.f32 %v432, 0.0
  %v669 = vmax.f32 %v435, 0.0
  %v670 = vmax.f32 %v440, 0.0
  %v671 = vmax.f32 %v443, 0.0
  %v672 = vmax.f32 %v448, 0.0
  %v673 = vmax.f32 %v451, 0.0
  %v674 = vmax.f32 %v456, 0.0
  %v675 = vmax.f32 %v459, 0.0
  %v676 = vmax.f32 %v464, 0.0
  %v677 = vmax.f32 %v467, 0.0
  %v678 = vmax.f32 %v472, 0.0
  %v679 = vmax.f32 %v475, 0.0
  %v680 = vmax.f32 %v480, 0.0
  %v681 = vmax.f32 %v483, 0.0
  %v682 = vmax.f32 %v488, 0.0
  %v683 = vmax.f32 %v491, 0.0
  %v684 = vmax.f32 %v496, 0.0
  %v685 = vmax.f32 %v499, 0.0
  %v686 = vmax.f32 %v504, 0.0
  %v687 = vmax.f32 %v507, 0.0
  %v688 = vmax.f32 %v512, 0.0
  %v689 = vmax.f32 %v515, 0.0
  %v690 = vmax.f32 %v520, 0.0
  %v691 = vmax.f32 %v523, 0.0
  %v692 = vmax.f32 %v528, 0.0
  %v693 = vmax.f32 %v531, 0.0
  %v694 = vmax.f32 %v536, 0.0
  %v695 = vmax.f32 %v539, 0.0
  %v696 = vmax.f32 %v544, 0.0
  %v697 = vmax.f32 %v547, 0.0
  %v698 = vmax.f32 %v552, 0.0
  %v699 = vmax.f32 %v555, 0.0
  %v700 = vmax.f32 %v560, 0.0
  %v701 = vmax.f32 %v563, 0.0
  %v702 = vmax.f32 %v568, 0.0
  %v703 = vmax.f32 %v571, 0.0
  %v704 = vmax.f32 %v576, 0.0
  %v705 = vmax.f32 %v579, 0.0
  %v706 = vmax.f32 %v584, 0.0
  %v707 = vmax.f32 %v587, 0.0
  %v708 = vmax.f32 %v592, 0.0
  %v709 = vmax.f32 %v595, 0.0
  %v710 = vmax.f32 %v600, 0.0
  %v711 = vmax.f32 %v603, 0.0
  %v712 = vmax.f32 %v608, 0.0
  %v713 = vmax.f32 %v611, 0.0
  %v714 = vmax.f32 %v616, 0.0
  %v715 = vmax.f32 %v619, 0.0
  %v716 = vmax.f32 %v624, 0.0
  %v717 = vmax.f32 %v627, 0.0
  %v718 = vmax.f32 %v632, 0.0
  %v719 = vmax.f32 %v635, 0.0
  %v720 = vmax.f32 %v640, 0.0
  %v721 = vmax.f32 %v643, 0.0
  %v722 = vmax.f32 %v648, 0.0
  %v723 = vmax.f32 %v651, 0.0
  %v724 = vmax.f32 %v656, 0.0
  %v725 = vmax.f32 %v659, 0.0
  %v726 = vpack.c.bf16 %v663, %v662
  %v727 = vpack.c.bf16 %v665, %v664
  %v728 = vpack.c.bf16 %v667, %v666
  %v729 = vpack.c.bf16 %v669, %v668
  %v730 = vpack.c.bf16 %v671, %v670
  %v731 = vpack.c.bf16 %v673, %v672
  %v732 = vpack.c.bf16 %v675, %v674
  %v733 = vpack.c.bf16 %v677, %v676
  %v734 = vpack.c.bf16 %v679, %v678
  %v735 = vpack.c.bf16 %v681, %v680
  %v736 = vpack.c.bf16 %v683, %v682
  %v737 = vpack.c.bf16 %v685, %v684
  %v738 = vpack.c.bf16 %v687, %v686
  %v739 = vpack.c.bf16 %v689, %v688
  %v740 = vpack.c.bf16 %v691, %v690
  %v741 = vpack.c.bf16 %v693, %v692
  %v742 = vpack.c.bf16 %v695, %v694
  %v743 = vpack.c.bf16 %v697, %v696
  %v744 = vpack.c.bf16 %v699, %v698
  %v745 = vpack.c.bf16 %v701, %v700
  %v746 = vpack.c.bf16 %v703, %v702
  %v747 = vpack.c.bf16 %v705, %v704
  %v748 = vpack.c.bf16 %v707, %v706
  %v749 = vpack.c.bf16 %v709, %v708
  %v750 = vpack.c.bf16 %v711, %v710
  %v751 = vpack.c.bf16 %v713, %v712
  %v752 = vpack.c.bf16 %v715, %v714
  %v753 = vpack.c.bf16 %v717, %v716
  %v754 = vpack.c.bf16 %v719, %v718
  %v755 = vpack.c.bf16 %v721, %v720
  %v756 = vpack.c.bf16 %v723, %v722
  %v757 = vpack.c.bf16 %v725, %v724
  %v758 = vld [vmem:[%s3] sm:$0xf]
  %v759 = vld [vmem:[%s3 + $0x4] sm:$0xf]
  %v760 = vld [vmem:[%s3 + $0x8] sm:$0xf]
  %v761 = vld [vmem:[%s3 + $0xc] sm:$0xf]
  %v762 = vld [vmem:[%s3 + $0x10] sm:$0xf]
  %v763 = vld [vmem:[%s3 + $0x14] sm:$0xf]
  %v764 = vld [vmem:[%s3 + $0x18] sm:$0xf]
  %v765 = vld [vmem:[%s3 + $0x1c] sm:$0xf]
  %v766 = vld [vmem:[%s4] sm:$0x1]
  %v768 = vlaneseq
  %v769 = vshrl.u32 %v768, 7
  %v770 = vsub.s32 0, %v769
  %v771 = vrot.slane %v766, %v770
  %v781 = vunpack.c.l.b16 %v758
  %v782 = vunpack.c.l.b16 %v759
  %v783 = vunpack.c.l.b16 %v760
  %v784 = vunpack.c.l.b16 %v761
  %v785 = vunpack.c.l.b16 %v762
  %v786 = vunpack.c.l.b16 %v763
  %v787 = vunpack.c.l.b16 %v764
  %v788 = vunpack.c.l.b16 %v765
  %v789 = vpack.c.b16 %v782, %v781
  %v790 = vpack.c.b16 %v784, %v783
  %v791 = vpack.c.b16 %v786, %v785
  %v792 = vpack.c.b16 %v788, %v787
  %vm797 = vcmask 523264
  %v799 = vsel %vm797, %v726, 0
  %v802 = vsel %vm797, %v727, 0
  %v805 = vsel %vm797, %v728, 0
  %v808 = vsel %vm797, %v729, 0
  %v811 = vsel %vm797, %v730, 0
  %v814 = vsel %vm797, %v731, 0
  %v817 = vsel %vm797, %v732, 0
  %v820 = vsel %vm797, %v733, 0
  %v823 = vsel %vm797, %v734, 0
  %v826 = vsel %vm797, %v735, 0
  %v829 = vsel %vm797, %v736, 0
  %v832 = vsel %vm797, %v737, 0
  %v835 = vsel %vm797, %v738, 0
  %v838 = vsel %vm797, %v739, 0
  %v841 = vsel %vm797, %v740, 0
  %v844 = vsel %vm797, %v741, 0
  %v847 = vsel %vm797, %v742, 0
  %v850 = vsel %vm797, %v743, 0
  %v853 = vsel %vm797, %v744, 0
  %v856 = vsel %vm797, %v745, 0
  %v859 = vsel %vm797, %v746, 0
  %v862 = vsel %vm797, %v747, 0
  %v865 = vsel %vm797, %v748, 0
  %v868 = vsel %vm797, %v749, 0
  %v871 = vsel %vm797, %v750, 0
  %v874 = vsel %vm797, %v751, 0
  %v877 = vsel %vm797, %v752, 0
  %v880 = vsel %vm797, %v753, 0
  %v883 = vsel %vm797, %v754, 0
  %v886 = vsel %vm797, %v755, 0
  %v889 = vsel %vm797, %v756, 0
  %v892 = vsel %vm797, %v757, 0
  %894 = vmatprep.subr.bf16.mxu0 0
  %895 = vmatpush1.bf16.msra.mxu0 %v789
  %896 = vmatprep.subr.bf16.mxu0 0
  %897 = vmatpush1.bf16.msra.mxu0 %v790
  %898 = vmatprep.subr.bf16.mxu0 0
  %899 = vmatpush1.bf16.msra.mxu0 %v791
  %900 = vmatprep.subr.bf16.mxu0 0
  %901 = vmatpush1.bf16.msra.mxu0 %v792
  %902 = vmatprep.subr.bf16.mxu0 0
  %903 = vmatpush1.bf16.msra.mxu0 0
  %904 = vmatprep.subr.bf16.mxu0 0
  %905 = vmatpush1.bf16.msra.mxu0 0
  %906 = vmatprep.subr.bf16.mxu0 0
  %907 = vmatpush1.bf16.msra.mxu0 0
  %908 = vmatprep.subr.bf16.mxu0 0
  %909 = vmatpush1.bf16.msra.mxu0 0
  %910 = vmatprep.subr.bf16.mxu0 0
  %911 = vmatpush1.bf16.msra.mxu0 0
  %912 = vmatprep.subr.bf16.mxu0 0
  %913 = vmatpush1.bf16.msra.mxu0 0
  %914 = vmatprep.subr.bf16.mxu0 0
  %915 = vmatpush1.bf16.msra.mxu0 0
  %916 = vmatprep.subr.bf16.mxu0 0
  %917 = vmatpush1.bf16.msra.mxu0 0
  %918 = vmatprep.subr.bf16.mxu0 0
  %919 = vmatpush1.bf16.msra.mxu0 0
  %920 = vmatprep.subr.bf16.mxu0 0
  %921 = vmatpush1.bf16.msra.mxu0 0
  %922 = vmatprep.subr.bf16.mxu0 0
  %923 = vmatpush1.bf16.msra.mxu0 0
  %924 = vmatprep.subr.bf16.mxu0 0
  %925 = vmatpush1.bf16.msra.mxu0 0
  %926 = vmatprep.mubr.bf16.mxu0 0
  %927 = vmatmul.mubr.bf16.gmra.mrb[0].mxu0 %v799
  %v928 = vpop.f32.mrb[0].mxu0
  %v929 = vadd.f32 %v771, %v928
  %v930 = vpop.f32.mrb[0].mxu0
  %v931 = vpop.f32.mrb[0].mxu0
  %v932 = vadd.f32 %v771, %v931
  %v933 = vpop.f32.mrb[0].mxu0
  %934 = vmatprep.mubr.bf16.mxu0 0
  %935 = vmatmul.mubr.bf16.gmra.mrb[0].mxu0 %v802
  %v936 = vpop.f32.mrb[0].mxu0
  %v937 = vadd.f32 %v771, %v936
  %v938 = vpop.f32.mrb[0].mxu0
  %v939 = vpop.f32.mrb[0].mxu0
  %v940 = vadd.f32 %v771, %v939
  %v941 = vpop.f32.mrb[0].mxu0
  %942 = vmatprep.mubr.bf16.mxu0 0
  %943 = vmatmul.mubr.bf16.gmra.mrb[0].mxu0 %v805
  %v944 = vpop.f32.mrb[0].mxu0
  %v945 = vadd.f32 %v771, %v944
  %v946 = vpop.f32.mrb[0].mxu0
  %v947 = vpop.f32.mrb[0].mxu0
  %v948 = vadd.f32 %v771, %v947
  %v949 = vpop.f32.mrb[0].mxu0
  %950 = vmatprep.mubr.bf16.mxu0 0
  %951 = vmatmul.mubr.bf16.gmra.mrb[0].mxu0 %v808
  %v952 = vpop.f32.mrb[0].mxu0
  %v953 = vadd.f32 %v771, %v952
  %v954 = vpop.f32.mrb[0].mxu0
  %v955 = vpop.f32.mrb[0].mxu0
  %v956 = vadd.f32 %v771, %v955
  %v957 = vpop.f32.mrb[0].mxu0
  %958 = vmatprep.mubr.bf16.mxu0 0
  %959 = vmatmul.mubr.bf16.gmra.mrb[0].mxu0 %v811
  %v960 = vpop.f32.mrb[0].mxu0
  %v961 = vadd.f32 %v771, %v960
  %v962 = vpop.f32.mrb[0].mxu0
  %v963 = vpop.f32.mrb[0].mxu0
  %v964 = vadd.f32 %v771, %v963
  %v965 = vpop.f32.mrb[0].mxu0
  %966 = vmatprep.mubr.bf16.mxu0 0
  %967 = vmatmul.mubr.bf16.gmra.mrb[0].mxu0 %v814
  %v968 = vpop.f32.mrb[0].mxu0
  %v969 = vadd.f32 %v771, %v968
  %v970 = vpop.f32.mrb[0].mxu0
  %v971 = vpop.f32.mrb[0].mxu0
  %v972 = vadd.f32 %v771, %v971
  %v973 = vpop.f32.mrb[0].mxu0
  %974 = vmatprep.mubr.bf16.mxu0 0
  %975 = vmatmul.mubr.bf16.gmra.mrb[0].mxu0 %v817
  %v976 = vpop.f32.mrb[0].mxu0
  %v977 = vadd.f32 %v771, %v976
  %v978 = vpop.f32.mrb[0].mxu0
  %v979 = vpop.f32.mrb[0].mxu0
  %v980 = vadd.f32 %v771, %v979
  %v981 = vpop.f32.mrb[0].mxu0
  %982 = vmatprep.mubr.bf16.mxu0 0
  %983 = vmatmul.mubr.bf16.gmra.mrb[0].mxu0 %v820
  %v984 = vpop.f32.mrb[0].mxu0
  %v985 = vadd.f32 %v771, %v984
  %v986 = vpop.f32.mrb[0].mxu0
  %v987 = vpop.f32.mrb[0].mxu0
  %v988 = vadd.f32 %v771, %v987
  %v989 = vpop.f32.mrb[0].mxu0
  %990 = vmatprep.mubr.bf16.mxu0 0
  %991 = vmatmul.mubr.bf16.gmra.mrb[0].mxu0 %v823
  %v992 = vpop.f32.mrb[0].mxu0
  %v993 = vadd.f32 %v771, %v992
  %v994 = vpop.f32.mrb[0].mxu0
  %v995 = vpop.f32.mrb[0].mxu0
  %v996 = vadd.f32 %v771, %v995
  %v997 = vpop.f32.mrb[0].mxu0
  %998 = vmatprep.mubr.bf16.mxu0 0
  %999 = vmatmul.mubr.bf16.gmra.mrb[0].mxu0 %v826
  %v1000 = vpop.f32.mrb[0].mxu0
  %v1001 = vadd.f32 %v771, %v1000
  %v1002 = vpop.f32.mrb[0].mxu0
  %v1003 = vpop.f32.mrb[0].mxu0
  %v1004 = vadd.f32 %v771, %v1003
  %v1005 = vpop.f32.mrb[0].mxu0
  %1006 = vmatprep.mubr.bf16.mxu0 0
  %1007 = vmatmul.mubr.bf16.gmra.mrb[0].mxu0 %v829
  %v1008 = vpop.f32.mrb[0].mxu0
  %v1009 = vadd.f32 %v771, %v1008
  %v1010 = vpop.f32.mrb[0].mxu0
  %v1011 = vpop.f32.mrb[0].mxu0
  %v1012 = vadd.f32 %v771, %v1011
  %v1013 = vpop.f32.mrb[0].mxu0
  %1014 = vmatprep.mubr.bf16.mxu0 0
  %1015 = vmatmul.mubr.bf16.gmra.mrb[0].mxu0 %v832
  %v1016 = vpop.f32.mrb[0].mxu0
  %v1017 = vadd.f32 %v771, %v1016
  %v1018 = vpop.f32.mrb[0].mxu0
  %v1019 = vpop.f32.mrb[0].mxu0
  %v1020 = vadd.f32 %v771, %v1019
  %v1021 = vpop.f32.mrb[0].mxu0
  %1022 = vmatprep.mubr.bf16.mxu0 0
  %1023 = vmatmul.mubr.bf16.gmra.mrb[0].mxu0 %v835
  %v1024 = vpop.f32.mrb[0].mxu0
  %v1025 = vadd.f32 %v771, %v1024
  %v1026 = vpop.f32.mrb[0].mxu0
  %v1027 = vpop.f32.mrb[0].mxu0
  %v1028 = vadd.f32 %v771, %v1027
  %v1029 = vpop.f32.mrb[0].mxu0
  %1030 = vmatprep.mubr.bf16.mxu0 0
  %1031 = vmatmul.mubr.bf16.gmra.mrb[0].mxu0 %v838
  %v1032 = vpop.f32.mrb[0].mxu0
  %v1033 = vadd.f32 %v771, %v1032
  %v1034 = vpop.f32.mrb[0].mxu0
  %v1035 = vpop.f32.mrb[0].mxu0
  %v1036 = vadd.f32 %v771, %v1035
  %v1037 = vpop.f32.mrb[0].mxu0
  %1038 = vmatprep.mubr.bf16.mxu0 0
  %1039 = vmatmul.mubr.bf16.gmra.mrb[0].mxu0 %v841
  %v1040 = vpop.f32.mrb[0].mxu0
  %v1041 = vadd.f32 %v771, %v1040
  %v1042 = vpop.f32.mrb[0].mxu0
  %v1043 = vpop.f32.mrb[0].mxu0
  %v1044 = vadd.f32 %v771, %v1043
  %v1045 = vpop.f32.mrb[0].mxu0
  %1046 = vmatprep.mubr.bf16.mxu0 0
  %1047 = vmatmul.mubr.bf16.gmra.mrb[0].mxu0 %v844
  %v1048 = vpop.f32.mrb[0].mxu0
  %v1049 = vadd.f32 %v771, %v1048
  %v1050 = vpop.f32.mrb[0].mxu0
  %v1051 = vpop.f32.mrb[0].mxu0
  %v1052 = vadd.f32 %v771, %v1051
  %v1053 = vpop.f32.mrb[0].mxu0
  %1054 = vmatprep.mubr.bf16.mxu0 0
  %1055 = vmatmul.mubr.bf16.gmra.mrb[0].mxu0 %v847
  %v1056 = vpop.f32.mrb[0].mxu0
  %v1057 = vadd.f32 %v771, %v1056
  %v1058 = vpop.f32.mrb[0].mxu0
  %v1059 = vpop.f32.mrb[0].mxu0
  %v1060 = vadd.f32 %v771, %v1059
  %v1061 = vpop.f32.mrb[0].mxu0
  %1062 = vmatprep.mubr.bf16.mxu0 0
  %1063 = vmatmul.mubr.bf16.gmra.mrb[0].mxu0 %v850
  %v1064 = vpop.f32.mrb[0].mxu0
  %v1065 = vadd.f32 %v771, %v1064
  %v1066 = vpop.f32.mrb[0].mxu0
  %v1067 = vpop.f32.mrb[0].mxu0
  %v1068 = vadd.f32 %v771, %v1067
  %v1069 = vpop.f32.mrb[0].mxu0
  %1070 = vmatprep.mubr.bf16.mxu0 0
  %1071 = vmatmul.mubr.bf16.gmra.mrb[0].mxu0 %v853
  %v1072 = vpop.f32.mrb[0].mxu0
  %v1073 = vadd.f32 %v771, %v1072
  %v1074 = vpop.f32.mrb[0].mxu0
  %v1075 = vpop.f32.mrb[0].mxu0
  %v1076 = vadd.f32 %v771, %v1075
  %v1077 = vpop.f32.mrb[0].mxu0
  %1078 = vmatprep.mubr.bf16.mxu0 0
  %1079 = vmatmul.mubr.bf16.gmra.mrb[0].mxu0 %v856
  %v1080 = vpop.f32.mrb[0].mxu0
  %v1081 = vadd.f32 %v771, %v1080
  %v1082 = vpop.f32.mrb[0].mxu0
  %v1083 = vpop.f32.mrb[0].mxu0
  %v1084 = vadd.f32 %v771, %v1083
  %v1085 = vpop.f32.mrb[0].mxu0
  %1086 = vmatprep.mubr.bf16.mxu0 0
  %1087 = vmatmul.mubr.bf16.gmra.mrb[0].mxu0 %v859
  %v1088 = vpop.f32.mrb[0].mxu0
  %v1089 = vadd.f32 %v771, %v1088
  %v1090 = vpop.f32.mrb[0].mxu0
  %v1091 = vpop.f32.mrb[0].mxu0
  %v1092 = vadd.f32 %v771, %v1091
  %v1093 = vpop.f32.mrb[0].mxu0
  %1094 = vmatprep.mubr.bf16.mxu0 0
  %1095 = vmatmul.mubr.bf16.gmra.mrb[0].mxu0 %v862
  %v1096 = vpop.f32.mrb[0].mxu0
  %v1097 = vadd.f32 %v771, %v1096
  %v1098 = vpop.f32.mrb[0].mxu0
  %v1099 = vpop.f32.mrb[0].mxu0
  %v1100 = vadd.f32 %v771, %v1099
  %v1101 = vpop.f32.mrb[0].mxu0
  %1102 = vmatprep.mubr.bf16.mxu0 0
  %1103 = vmatmul.mubr.bf16.gmra.mrb[0].mxu0 %v865
  %v1104 = vpop.f32.mrb[0].mxu0
  %v1105 = vadd.f32 %v771, %v1104
  %v1106 = vpop.f32.mrb[0].mxu0
  %v1107 = vpop.f32.mrb[0].mxu0
  %v1108 = vadd.f32 %v771, %v1107
  %v1109 = vpop.f32.mrb[0].mxu0
  %1110 = vmatprep.mubr.bf16.mxu0 0
  %1111 = vmatmul.mubr.bf16.gmra.mrb[0].mxu0 %v868
  %v1112 = vpop.f32.mrb[0].mxu0
  %v1113 = vadd.f32 %v771, %v1112
  %v1114 = vpop.f32.mrb[0].mxu0
  %v1115 = vpop.f32.mrb[0].mxu0
  %v1116 = vadd.f32 %v771, %v1115
  %v1117 = vpop.f32.mrb[0].mxu0
  %1118 = vmatprep.mubr.bf16.mxu0 0
  %1119 = vmatmul.mubr.bf16.gmra.mrb[0].mxu0 %v871
  %v1120 = vpop.f32.mrb[0].mxu0
  %v1121 = vadd.f32 %v771, %v1120
  %v1122 = vpop.f32.mrb[0].mxu0
  %v1123 = vpop.f32.mrb[0].mxu0
  %v1124 = vadd.f32 %v771, %v1123
  %v1125 = vpop.f32.mrb[0].mxu0
  %1126 = vmatprep.mubr.bf16.mxu0 0
  %1127 = vmatmul.mubr.bf16.gmra.mrb[0].mxu0 %v874
  %v1128 = vpop.f32.mrb[0].mxu0
  %v1129 = vadd.f32 %v771, %v1128
  %v1130 = vpop.f32.mrb[0].mxu0
  %v1131 = vpop.f32.mrb[0].mxu0
  %v1132 = vadd.f32 %v771, %v1131
  %v1133 = vpop.f32.mrb[0].mxu0
  %1134 = vmatprep.mubr.bf16.mxu0 0
  %1135 = vmatmul.mubr.bf16.gmra.mrb[0].mxu0 %v877
  %v1136 = vpop.f32.mrb[0].mxu0
  %v1137 = vadd.f32 %v771, %v1136
  %v1138 = vpop.f32.mrb[0].mxu0
  %v1139 = vpop.f32.mrb[0].mxu0
  %v1140 = vadd.f32 %v771, %v1139
  %v1141 = vpop.f32.mrb[0].mxu0
  %1142 = vmatprep.mubr.bf16.mxu0 0
  %1143 = vmatmul.mubr.bf16.gmra.mrb[0].mxu0 %v880
  %v1144 = vpop.f32.mrb[0].mxu0
  %v1145 = vadd.f32 %v771, %v1144
  %v1146 = vpop.f32.mrb[0].mxu0
  %v1147 = vpop.f32.mrb[0].mxu0
  %v1148 = vadd.f32 %v771, %v1147
  %v1149 = vpop.f32.mrb[0].mxu0
  %1150 = vmatprep.mubr.bf16.mxu0 0
  %1151 = vmatmul.mubr.bf16.gmra.mrb[0].mxu0 %v883
  %v1152 = vpop.f32.mrb[0].mxu0
  %v1153 = vadd.f32 %v771, %v1152
  %v1154 = vpop.f32.mrb[0].mxu0
  %v1155 = vpop.f32.mrb[0].mxu0
  %v1156 = vadd.f32 %v771, %v1155
  %v1157 = vpop.f32.mrb[0].mxu0
  %1158 = vmatprep.mubr.bf16.mxu0 0
  %1159 = vmatmul.mubr.bf16.gmra.mrb[0].mxu0 %v886
  %v1160 = vpop.f32.mrb[0].mxu0
  %v1161 = vadd.f32 %v771, %v1160
  %v1162 = vpop.f32.mrb[0].mxu0
  %v1163 = vpop.f32.mrb[0].mxu0
  %v1164 = vadd.f32 %v771, %v1163
  %v1165 = vpop.f32.mrb[0].mxu0
  %1166 = vmatprep.mubr.bf16.mxu0 0
  %1167 = vmatmul.mubr.bf16.gmra.mrb[0].mxu0 %v889
  %v1168 = vpop.f32.mrb[0].mxu0
  %v1169 = vadd.f32 %v771, %v1168
  %v1170 = vpop.f32.mrb[0].mxu0
  %v1171 = vpop.f32.mrb[0].mxu0
  %v1172 = vadd.f32 %v771, %v1171
  %v1173 = vpop.f32.mrb[0].mxu0
  %1174 = vmatprep.mubr.bf16.mxu0 0
  %1175 = vmatmul.mubr.bf16.gmra.mrb[0].mxu0 %v892
  %v1176 = vpop.f32.mrb[0].mxu0
  %v1177 = vadd.f32 %v771, %v1176
  %v1178 = vpop.f32.mrb[0].mxu0
  %v1179 = vpop.f32.mrb[0].mxu0
  %v1180 = vadd.f32 %v771, %v1179
  %v1181 = vpop.f32.mrb[0].mxu0
  %1182 = vdwg.mxu0
  %v1183 = vmax.f32 %v929, 0.0
  %v1184 = vmax.f32 %v932, 0.0
  %v1185 = vmax.f32 %v937, 0.0
  %v1186 = vmax.f32 %v940, 0.0
  %v1187 = vmax.f32 %v945, 0.0
  %v1188 = vmax.f32 %v948, 0.0
  %v1189 = vmax.f32 %v953, 0.0
  %v1190 = vmax.f32 %v956, 0.0
  %v1191 = vmax.f32 %v961, 0.0
  %v1192 = vmax.f32 %v964, 0.0
  %v1193 = vmax.f32 %v969, 0.0
  %v1194 = vmax.f32 %v972, 0.0
  %v1195 = vmax.f32 %v977, 0.0
  %v1196 = vmax.f32 %v980, 0.0
  %v1197 = vmax.f32 %v985, 0.0
  %v1198 = vmax.f32 %v988, 0.0
  %v1199 = vmax.f32 %v993, 0.0
  %v1200 = vmax.f32 %v996, 0.0
  %v1201 = vmax.f32 %v1001, 0.0
  %v1202 = vmax.f32 %v1004, 0.0
  %v1203 = vmax.f32 %v1009, 0.0
  %v1204 = vmax.f32 %v1012, 0.0
  %v1205 = vmax.f32 %v1017, 0.0
  %v1206 = vmax.f32 %v1020, 0.0
  %v1207 = vmax.f32 %v1025, 0.0
  %v1208 = vmax.f32 %v1028, 0.0
  %v1209 = vmax.f32 %v1033, 0.0
  %v1210 = vmax.f32 %v1036, 0.0
  %v1211 = vmax.f32 %v1041, 0.0
  %v1212 = vmax.f32 %v1044, 0.0
  %v1213 = vmax.f32 %v1049, 0.0
  %v1214 = vmax.f32 %v1052, 0.0
  %v1215 = vmax.f32 %v1057, 0.0
  %v1216 = vmax.f32 %v1060, 0.0
  %v1217 = vmax.f32 %v1065, 0.0
  %v1218 = vmax.f32 %v1068, 0.0
  %v1219 = vmax.f32 %v1073, 0.0
  %v1220 = vmax.f32 %v1076, 0.0
  %v1221 = vmax.f32 %v1081, 0.0
  %v1222 = vmax.f32 %v1084, 0.0
  %v1223 = vmax.f32 %v1089, 0.0
  %v1224 = vmax.f32 %v1092, 0.0
  %v1225 = vmax.f32 %v1097, 0.0
  %v1226 = vmax.f32 %v1100, 0.0
  %v1227 = vmax.f32 %v1105, 0.0
  %v1228 = vmax.f32 %v1108, 0.0
  %v1229 = vmax.f32 %v1113, 0.0
  %v1230 = vmax.f32 %v1116, 0.0
  %v1231 = vmax.f32 %v1121, 0.0
  %v1232 = vmax.f32 %v1124, 0.0
  %v1233 = vmax.f32 %v1129, 0.0
  %v1234 = vmax.f32 %v1132, 0.0
  %v1235 = vmax.f32 %v1137, 0.0
  %v1236 = vmax.f32 %v1140, 0.0
  %v1237 = vmax.f32 %v1145, 0.0
  %v1238 = vmax.f32 %v1148, 0.0
  %v1239 = vmax.f32 %v1153, 0.0
  %v1240 = vmax.f32 %v1156, 0.0
  %v1241 = vmax.f32 %v1161, 0.0
  %v1242 = vmax.f32 %v1164, 0.0
  %v1243 = vmax.f32 %v1169, 0.0
  %v1244 = vmax.f32 %v1172, 0.0
  %v1245 = vmax.f32 %v1177, 0.0
  %v1246 = vmax.f32 %v1180, 0.0
  %v1247 = vld [vmem:[%s5] sm:$0x1]
  %v1249 = vlaneseq
  %v1250 = vshrl.u32 %v1249, 7
  %v1251 = vsub.s32 0, %v1250
  %v1252 = vrot.slane %v1247, %v1251
  %v1254 = vmul.f32 %v1183, %v1252
  %v1255 = vmul.f32 %v1184, %v1252
  %v1256 = vmul.f32 %v1185, %v1252
  %v1257 = vmul.f32 %v1186, %v1252
  %v1258 = vmul.f32 %v1187, %v1252
  %v1259 = vmul.f32 %v1188, %v1252
  %v1260 = vmul.f32 %v1189, %v1252
  %v1261 = vmul.f32 %v1190, %v1252
  %v1262 = vmul.f32 %v1191, %v1252
  %v1263 = vmul.f32 %v1192, %v1252
  %v1264 = vmul.f32 %v1193, %v1252
  %v1265 = vmul.f32 %v1194, %v1252
  %v1266 = vmul.f32 %v1195, %v1252
  %v1267 = vmul.f32 %v1196, %v1252
  %v1268 = vmul.f32 %v1197, %v1252
  %v1269 = vmul.f32 %v1198, %v1252
  %v1270 = vmul.f32 %v1199, %v1252
  %v1271 = vmul.f32 %v1200, %v1252
  %v1272 = vmul.f32 %v1201, %v1252
  %v1273 = vmul.f32 %v1202, %v1252
  %v1274 = vmul.f32 %v1203, %v1252
  %v1275 = vmul.f32 %v1204, %v1252
  %v1276 = vmul.f32 %v1205, %v1252
  %v1277 = vmul.f32 %v1206, %v1252
  %v1278 = vmul.f32 %v1207, %v1252
  %v1279 = vmul.f32 %v1208, %v1252
  %v1280 = vmul.f32 %v1209, %v1252
  %v1281 = vmul.f32 %v1210, %v1252
  %v1282 = vmul.f32 %v1211, %v1252
  %v1283 = vmul.f32 %v1212, %v1252
  %v1284 = vmul.f32 %v1213, %v1252
  %v1285 = vmul.f32 %v1214, %v1252
  %v1286 = vmul.f32 %v1215, %v1252
  %v1287 = vmul.f32 %v1216, %v1252
  %v1288 = vmul.f32 %v1217, %v1252
  %v1289 = vmul.f32 %v1218, %v1252
  %v1290 = vmul.f32 %v1219, %v1252
  %v1291 = vmul.f32 %v1220, %v1252
  %v1292 = vmul.f32 %v1221, %v1252
  %v1293 = vmul.f32 %v1222, %v1252
  %v1294 = vmul.f32 %v1223, %v1252
  %v1295 = vmul.f32 %v1224, %v1252
  %v1296 = vmul.f32 %v1225, %v1252
  %v1297 = vmul.f32 %v1226, %v1252
  %v1298 = vmul.f32 %v1227, %v1252
  %v1299 = vmul.f32 %v1228, %v1252
  %v1300 = vmul.f32 %v1229, %v1252
  %v1301 = vmul.f32 %v1230, %v1252
  %v1302 = vmul.f32 %v1231, %v1252
  %v1303 = vmul.f32 %v1232, %v1252
  %v1304 = vmul.f32 %v1233, %v1252
  %v1305 = vmul.f32 %v1234, %v1252
  %v1306 = vmul.f32 %v1235, %v1252
  %v1307 = vmul.f32 %v1236, %v1252
  %v1308 = vmul.f32 %v1237, %v1252
  %v1309 = vmul.f32 %v1238, %v1252
  %v1310 = vmul.f32 %v1239, %v1252
  %v1311 = vmul.f32 %v1240, %v1252
  %v1312 = vmul.f32 %v1241, %v1252
  %v1313 = vmul.f32 %v1242, %v1252
  %v1314 = vmul.f32 %v1243, %v1252
  %v1315 = vmul.f32 %v1244, %v1252
  %v1316 = vmul.f32 %v1245, %v1252
  %v1317 = vmul.f32 %v1246, %v1252
  %v1318 = vsel %vm276, %v1254, 0.0
  %1319 = vadd.xlane.f32.xlu0 %v1318
  %v1320 = vpop.xlane.xlu0 %1319
  %v1321 = vsel %vm276, %v1255, 0.0
  %1322 = vadd.xlane.f32.xlu0 %v1321
  %v1323 = vpop.xlane.xlu0 %1322
  %v1324 = vsel %vm276, %v1256, 0.0
  %1325 = vadd.xlane.f32.xlu0 %v1324
  %v1326 = vpop.xlane.xlu0 %1325
  %v1327 = vsel %vm276, %v1257, 0.0
  %1328 = vadd.xlane.f32.xlu0 %v1327
  %v1329 = vpop.xlane.xlu0 %1328
  %v1330 = vsel %vm276, %v1258, 0.0
  %1331 = vadd.xlane.f32.xlu0 %v1330
  %v1332 = vpop.xlane.xlu0 %1331
  %v1333 = vsel %vm276, %v1259, 0.0
  %1334 = vadd.xlane.f32.xlu0 %v1333
  %v1335 = vpop.xlane.xlu0 %1334
  %v1336 = vsel %vm276, %v1260, 0.0
  %1337 = vadd.xlane.f32.xlu0 %v1336
  %v1338 = vpop.xlane.xlu0 %1337
  %v1339 = vsel %vm276, %v1261, 0.0
  %1340 = vadd.xlane.f32.xlu0 %v1339
  %v1341 = vpop.xlane.xlu0 %1340
  %v1342 = vsel %vm276, %v1262, 0.0
  %1343 = vadd.xlane.f32.xlu0 %v1342
  %v1344 = vpop.xlane.xlu0 %1343
  %v1345 = vsel %vm276, %v1263, 0.0
  %1346 = vadd.xlane.f32.xlu0 %v1345
  %v1347 = vpop.xlane.xlu0 %1346
  %v1348 = vsel %vm276, %v1264, 0.0
  %1349 = vadd.xlane.f32.xlu0 %v1348
  %v1350 = vpop.xlane.xlu0 %1349
  %v1351 = vsel %vm276, %v1265, 0.0
  %1352 = vadd.xlane.f32.xlu0 %v1351
  %v1353 = vpop.xlane.xlu0 %1352
  %v1354 = vsel %vm276, %v1266, 0.0
  %1355 = vadd.xlane.f32.xlu0 %v1354
  %v1356 = vpop.xlane.xlu0 %1355
  %v1357 = vsel %vm276, %v1267, 0.0
  %1358 = vadd.xlane.f32.xlu0 %v1357
  %v1359 = vpop.xlane.xlu0 %1358
  %v1360 = vsel %vm276, %v1268, 0.0
  %1361 = vadd.xlane.f32.xlu0 %v1360
  %v1362 = vpop.xlane.xlu0 %1361
  %v1363 = vsel %vm276, %v1269, 0.0
  %1364 = vadd.xlane.f32.xlu0 %v1363
  %v1365 = vpop.xlane.xlu0 %1364
  %v1366 = vsel %vm276, %v1270, 0.0
  %1367 = vadd.xlane.f32.xlu0 %v1366
  %v1368 = vpop.xlane.xlu0 %1367
  %v1369 = vsel %vm276, %v1271, 0.0
  %1370 = vadd.xlane.f32.xlu0 %v1369
  %v1371 = vpop.xlane.xlu0 %1370
  %v1372 = vsel %vm276, %v1272, 0.0
  %1373 = vadd.xlane.f32.xlu0 %v1372
  %v1374 = vpop.xlane.xlu0 %1373
  %v1375 = vsel %vm276, %v1273, 0.0
  %1376 = vadd.xlane.f32.xlu0 %v1375
  %v1377 = vpop.xlane.xlu0 %1376
  %v1378 = vsel %vm276, %v1274, 0.0
  %1379 = vadd.xlane.f32.xlu0 %v1378
  %v1380 = vpop.xlane.xlu0 %1379
  %v1381 = vsel %vm276, %v1275, 0.0
  %1382 = vadd.xlane.f32.xlu0 %v1381
  %v1383 = vpop.xlane.xlu0 %1382
  %v1384 = vsel %vm276, %v1276, 0.0
  %1385 = vadd.xlane.f32.xlu0 %v1384
  %v1386 = vpop.xlane.xlu0 %1385
  %v1387 = vsel %vm276, %v1277, 0.0
  %1388 = vadd.xlane.f32.xlu0 %v1387
  %v1389 = vpop.xlane.xlu0 %1388
  %v1390 = vsel %vm276, %v1278, 0.0
  %1391 = vadd.xlane.f32.xlu0 %v1390
  %v1392 = vpop.xlane.xlu0 %1391
  %v1393 = vsel %vm276, %v1279, 0.0
  %1394 = vadd.xlane.f32.xlu0 %v1393
  %v1395 = vpop.xlane.xlu0 %1394
  %v1396 = vsel %vm276, %v1280, 0.0
  %1397 = vadd.xlane.f32.xlu0 %v1396
  %v1398 = vpop.xlane.xlu0 %1397
  %v1399 = vsel %vm276, %v1281, 0.0
  %1400 = vadd.xlane.f32.xlu0 %v1399
  %v1401 = vpop.xlane.xlu0 %1400
  %v1402 = vsel %vm276, %v1282, 0.0
  %1403 = vadd.xlane.f32.xlu0 %v1402
  %v1404 = vpop.xlane.xlu0 %1403
  %v1405 = vsel %vm276, %v1283, 0.0
  %1406 = vadd.xlane.f32.xlu0 %v1405
  %v1407 = vpop.xlane.xlu0 %1406
  %v1408 = vsel %vm276, %v1284, 0.0
  %1409 = vadd.xlane.f32.xlu0 %v1408
  %v1410 = vpop.xlane.xlu0 %1409
  %v1411 = vsel %vm276, %v1285, 0.0
  %1412 = vadd.xlane.f32.xlu0 %v1411
  %v1413 = vpop.xlane.xlu0 %1412
  %v1414 = vsel %vm276, %v1286, 0.0
  %1415 = vadd.xlane.f32.xlu0 %v1414
  %v1416 = vpop.xlane.xlu0 %1415
  %v1417 = vsel %vm276, %v1287, 0.0
  %1418 = vadd.xlane.f32.xlu0 %v1417
  %v1419 = vpop.xlane.xlu0 %1418
  %v1420 = vsel %vm276, %v1288, 0.0
  %1421 = vadd.xlane.f32.xlu0 %v1420
  %v1422 = vpop.xlane.xlu0 %1421
  %v1423 = vsel %vm276, %v1289, 0.0
  %1424 = vadd.xlane.f32.xlu0 %v1423
  %v1425 = vpop.xlane.xlu0 %1424
  %v1426 = vsel %vm276, %v1290, 0.0
  %1427 = vadd.xlane.f32.xlu0 %v1426
  %v1428 = vpop.xlane.xlu0 %1427
  %v1429 = vsel %vm276, %v1291, 0.0
  %1430 = vadd.xlane.f32.xlu0 %v1429
  %v1431 = vpop.xlane.xlu0 %1430
  %v1432 = vsel %vm276, %v1292, 0.0
  %1433 = vadd.xlane.f32.xlu0 %v1432
  %v1434 = vpop.xlane.xlu0 %1433
  %v1435 = vsel %vm276, %v1293, 0.0
  %1436 = vadd.xlane.f32.xlu0 %v1435
  %v1437 = vpop.xlane.xlu0 %1436
  %v1438 = vsel %vm276, %v1294, 0.0
  %1439 = vadd.xlane.f32.xlu0 %v1438
  %v1440 = vpop.xlane.xlu0 %1439
  %v1441 = vsel %vm276, %v1295, 0.0
  %1442 = vadd.xlane.f32.xlu0 %v1441
  %v1443 = vpop.xlane.xlu0 %1442
  %v1444 = vsel %vm276, %v1296, 0.0
  %1445 = vadd.xlane.f32.xlu0 %v1444
  %v1446 = vpop.xlane.xlu0 %1445
  %v1447 = vsel %vm276, %v1297, 0.0
  %1448 = vadd.xlane.f32.xlu0 %v1447
  %v1449 = vpop.xlane.xlu0 %1448
  %v1450 = vsel %vm276, %v1298, 0.0
  %1451 = vadd.xlane.f32.xlu0 %v1450
  %v1452 = vpop.xlane.xlu0 %1451
  %v1453 = vsel %vm276, %v1299, 0.0
  %1454 = vadd.xlane.f32.xlu0 %v1453
  %v1455 = vpop.xlane.xlu0 %1454
  %v1456 = vsel %vm276, %v1300, 0.0
  %1457 = vadd.xlane.f32.xlu0 %v1456
  %v1458 = vpop.xlane.xlu0 %1457
  %v1459 = vsel %vm276, %v1301, 0.0
  %1460 = vadd.xlane.f32.xlu0 %v1459
  %v1461 = vpop.xlane.xlu0 %1460
  %v1462 = vsel %vm276, %v1302, 0.0
  %1463 = vadd.xlane.f32.xlu0 %v1462
  %v1464 = vpop.xlane.xlu0 %1463
  %v1465 = vsel %vm276, %v1303, 0.0
  %1466 = vadd.xlane.f32.xlu0 %v1465
  %v1467 = vpop.xlane.xlu0 %1466
  %v1468 = vsel %vm276, %v1304, 0.0
  %1469 = vadd.xlane.f32.xlu0 %v1468
  %v1470 = vpop.xlane.xlu0 %1469
  %v1471 = vsel %vm276, %v1305, 0.0
  %1472 = vadd.xlane.f32.xlu0 %v1471
  %v1473 = vpop.xlane.xlu0 %1472
  %v1474 = vsel %vm276, %v1306, 0.0
  %1475 = vadd.xlane.f32.xlu0 %v1474
  %v1476 = vpop.xlane.xlu0 %1475
  %v1477 = vsel %vm276, %v1307, 0.0
  %1478 = vadd.xlane.f32.xlu0 %v1477
  %v1479 = vpop.xlane.xlu0 %1478
  %v1480 = vsel %vm276, %v1308, 0.0
  %1481 = vadd.xlane.f32.xlu0 %v1480
  %v1482 = vpop.xlane.xlu0 %1481
  %v1483 = vsel %vm276, %v1309, 0.0
  %1484 = vadd.xlane.f32.xlu0 %v1483
  %v1485 = vpop.xlane.xlu0 %1484
  %v1486 = vsel %vm276, %v1310, 0.0
  %1487 = vadd.xlane.f32.xlu0 %v1486
  %v1488 = vpop.xlane.xlu0 %1487
  %v1489 = vsel %vm276, %v1311, 0.0
  %1490 = vadd.xlane.f32.xlu0 %v1489
  %v1491 = vpop.xlane.xlu0 %1490
  %v1492 = vsel %vm276, %v1312, 0.0
  %1493 = vadd.xlane.f32.xlu0 %v1492
  %v1494 = vpop.xlane.xlu0 %1493
  %v1495 = vsel %vm276, %v1313, 0.0
  %1496 = vadd.xlane.f32.xlu0 %v1495
  %v1497 = vpop.xlane.xlu0 %1496
  %v1498 = vsel %vm276, %v1314, 0.0
  %1499 = vadd.xlane.f32.xlu0 %v1498
  %v1500 = vpop.xlane.xlu0 %1499
  %v1501 = vsel %vm276, %v1315, 0.0
  %1502 = vadd.xlane.f32.xlu0 %v1501
  %v1503 = vpop.xlane.xlu0 %1502
  %v1504 = vsel %vm276, %v1316, 0.0
  %1505 = vadd.xlane.f32.xlu0 %v1504
  %v1506 = vpop.xlane.xlu0 %1505
  %v1507 = vsel %vm276, %v1317, 0.0
  %1508 = vadd.xlane.f32.xlu0 %v1507
  %v1509 = vpop.xlane.xlu0 %1508
  %v1510 = vld [vmem:[#allocation2] sm:$0x1]
  %v1512 = vlaneseq
  %v1513 = vshrl.u32 %v1512, 7
  %v1514 = vsub.s32 0, %v1513
  %v1515 = vrot.slane %v1510, %v1514
  %v1517 = vadd.f32 %v1320, %v1515
  %v1518 = vadd.f32 %v1323, %v1515
  %v1519 = vadd.f32 %v1326, %v1515
  %v1520 = vadd.f32 %v1329, %v1515
  %v1521 = vadd.f32 %v1332, %v1515
  %v1522 = vadd.f32 %v1335, %v1515
  %v1523 = vadd.f32 %v1338, %v1515
  %v1524 = vadd.f32 %v1341, %v1515
  %v1525 = vadd.f32 %v1344, %v1515
  %v1526 = vadd.f32 %v1347, %v1515
  %v1527 = vadd.f32 %v1350, %v1515
  %v1528 = vadd.f32 %v1353, %v1515
  %v1529 = vadd.f32 %v1356, %v1515
  %v1530 = vadd.f32 %v1359, %v1515
  %v1531 = vadd.f32 %v1362, %v1515
  %v1532 = vadd.f32 %v1365, %v1515
  %v1533 = vadd.f32 %v1368, %v1515
  %v1534 = vadd.f32 %v1371, %v1515
  %v1535 = vadd.f32 %v1374, %v1515
  %v1536 = vadd.f32 %v1377, %v1515
  %v1537 = vadd.f32 %v1380, %v1515
  %v1538 = vadd.f32 %v1383, %v1515
  %v1539 = vadd.f32 %v1386, %v1515
  %v1540 = vadd.f32 %v1389, %v1515
  %v1541 = vadd.f32 %v1392, %v1515
  %v1542 = vadd.f32 %v1395, %v1515
  %v1543 = vadd.f32 %v1398, %v1515
  %v1544 = vadd.f32 %v1401, %v1515
  %v1545 = vadd.f32 %v1404, %v1515
  %v1546 = vadd.f32 %v1407, %v1515
  %v1547 = vadd.f32 %v1410, %v1515
  %v1548 = vadd.f32 %v1413, %v1515
  %v1549 = vadd.f32 %v1416, %v1515
  %v1550 = vadd.f32 %v1419, %v1515
  %v1551 = vadd.f32 %v1422, %v1515
  %v1552 = vadd.f32 %v1425, %v1515
  %v1553 = vadd.f32 %v1428, %v1515
  %v1554 = vadd.f32 %v1431, %v1515
  %v1555 = vadd.f32 %v1434, %v1515
  %v1556 = vadd.f32 %v1437, %v1515
  %v1557 = vadd.f32 %v1440, %v1515
  %v1558 = vadd.f32 %v1443, %v1515
  %v1559 = vadd.f32 %v1446, %v1515
  %v1560 = vadd.f32 %v1449, %v1515
  %v1561 = vadd.f32 %v1452, %v1515
  %v1562 = vadd.f32 %v1455, %v1515
  %v1563 = vadd.f32 %v1458, %v1515
  %v1564 = vadd.f32 %v1461, %v1515
  %v1565 = vadd.f32 %v1464, %v1515
  %v1566 = vadd.f32 %v1467, %v1515
  %v1567 = vadd.f32 %v1470, %v1515
  %v1568 = vadd.f32 %v1473, %v1515
  %v1569 = vadd.f32 %v1476, %v1515
  %v1570 = vadd.f32 %v1479, %v1515
  %v1571 = vadd.f32 %v1482, %v1515
  %v1572 = vadd.f32 %v1485, %v1515
  %v1573 = vadd.f32 %v1488, %v1515
  %v1574 = vadd.f32 %v1491, %v1515
  %v1575 = vadd.f32 %v1494, %v1515
  %v1576 = vadd.f32 %v1497, %v1515
  %v1577 = vadd.f32 %v1500, %v1515
  %v1578 = vadd.f32 %v1503, %v1515
  %v1579 = vadd.f32 %v1506, %v1515
  %v1580 = vadd.f32 %v1509, %v1515
  %v1581 = vsub.f32 0.0, %v1517
  %v1582 = vsub.f32 0.0, %v1518
  %v1583 = vsub.f32 0.0, %v1519
  %v1584 = vsub.f32 0.0, %v1520
  %v1585 = vsub.f32 0.0, %v1521
  %v1586 = vsub.f32 0.0, %v1522
  %v1587 = vsub.f32 0.0, %v1523
  %v1588 = vsub.f32 0.0, %v1524
  %v1589 = vsub.f32 0.0, %v1525
  %v1590 = vsub.f32 0.0, %v1526
  %v1591 = vsub.f32 0.0, %v1527
  %v1592 = vsub.f32 0.0, %v1528
  %v1593 = vsub.f32 0.0, %v1529
  %v1594 = vsub.f32 0.0, %v1530
  %v1595 = vsub.f32 0.0, %v1531
  %v1596 = vsub.f32 0.0, %v1532
  %v1597 = vsub.f32 0.0, %v1533
  %v1598 = vsub.f32 0.0, %v1534
  %v1599 = vsub.f32 0.0, %v1535
  %v1600 = vsub.f32 0.0, %v1536
  %v1601 = vsub.f32 0.0, %v1537
  %v1602 = vsub.f32 0.0, %v1538
  %v1603 = vsub.f32 0.0, %v1539
  %v1604 = vsub.f32 0.0, %v1540
  %v1605 = vsub.f32 0.0, %v1541
  %v1606 = vsub.f32 0.0, %v1542
  %v1607 = vsub.f32 0.0, %v1543
  %v1608 = vsub.f32 0.0, %v1544
  %v1609 = vsub.f32 0.0, %v1545
  %v1610 = vsub.f32 0.0, %v1546
  %v1611 = vsub.f32 0.0, %v1547
  %v1612 = vsub.f32 0.0, %v1548
  %v1613 = vsub.f32 0.0, %v1549
  %v1614 = vsub.f32 0.0, %v1550
  %v1615 = vsub.f32 0.0, %v1551
  %v1616 = vsub.f32 0.0, %v1552
  %v1617 = vsub.f32 0.0, %v1553
  %v1618 = vsub.f32 0.0, %v1554
  %v1619 = vsub.f32 0.0, %v1555
  %v1620 = vsub.f32 0.0, %v1556
  %v1621 = vsub.f32 0.0, %v1557
  %v1622 = vsub.f32 0.0, %v1558
  %v1623 = vsub.f32 0.0, %v1559
  %v1624 = vsub.f32 0.0, %v1560
  %v1625 = vsub.f32 0.0, %v1561
  %v1626 = vsub.f32 0.0, %v1562
  %v1627 = vsub.f32 0.0, %v1563
  %v1628 = vsub.f32 0.0, %v1564
  %v1629 = vsub.f32 0.0, %v1565
  %v1630 = vsub.f32 0.0, %v1566
  %v1631 = vsub.f32 0.0, %v1567
  %v1632 = vsub.f32 0.0, %v1568
  %v1633 = vsub.f32 0.0, %v1569
  %v1634 = vsub.f32 0.0, %v1570
  %v1635 = vsub.f32 0.0, %v1571
  %v1636 = vsub.f32 0.0, %v1572
  %v1637 = vsub.f32 0.0, %v1573
  %v1638 = vsub.f32 0.0, %v1574
  %v1639 = vsub.f32 0.0, %v1575
  %v1640 = vsub.f32 0.0, %v1576
  %v1641 = vsub.f32 0.0, %v1577
  %v1642 = vsub.f32 0.0, %v1578
  %v1643 = vsub.f32 0.0, %v1579
  %v1644 = vsub.f32 0.0, %v1580
  %v1645 = vmul.f32 %v1581, 1.442695
  %v1646 = vpow.pop %v1645
  %v1647 = vmul.f32 %v1582, 1.442695
  %v1648 = vpow.pop %v1647
  %v1649 = vmul.f32 %v1583, 1.442695
  %v1650 = vpow.pop %v1649
  %v1651 = vmul.f32 %v1584, 1.442695
  %v1652 = vpow.pop %v1651
  %v1653 = vmul.f32 %v1585, 1.442695
  %v1654 = vpow.pop %v1653
  %v1655 = vmul.f32 %v1586, 1.442695
  %v1656 = vpow.pop %v1655
  %v1657 = vmul.f32 %v1587, 1.442695
  %v1658 = vpow.pop %v1657
  %v1659 = vmul.f32 %v1588, 1.442695
  %v1660 = vpow.pop %v1659
  %v1661 = vmul.f32 %v1589, 1.442695
  %v1662 = vpow.pop %v1661
  %v1663 = vmul.f32 %v1590, 1.442695
  %v1664 = vpow.pop %v1663
  %v1665 = vmul.f32 %v1591, 1.442695
  %v1666 = vpow.pop %v1665
  %v1667 = vmul.f32 %v1592, 1.442695
  %v1668 = vpow.pop %v1667
  %v1669 = vmul.f32 %v1593, 1.442695
  %v1670 = vpow.pop %v1669
  %v1671 = vmul.f32 %v1594, 1.442695
  %v1672 = vpow.pop %v1671
  %v1673 = vmul.f32 %v1595, 1.442695
  %v1674 = vpow.pop %v1673
  %v1675 = vmul.f32 %v1596, 1.442695
  %v1676 = vpow.pop %v1675
  %v1677 = vmul.f32 %v1597, 1.442695
  %v1678 = vpow.pop %v1677
  %v1679 = vmul.f32 %v1598, 1.442695
  %v1680 = vpow.pop %v1679
  %v1681 = vmul.f32 %v1599, 1.442695
  %v1682 = vpow.pop %v1681
  %v1683 = vmul.f32 %v1600, 1.442695
  %v1684 = vpow.pop %v1683
  %v1685 = vmul.f32 %v1601, 1.442695
  %v1686 = vpow.pop %v1685
  %v1687 = vmul.f32 %v1602, 1.442695
  %v1688 = vpow.pop %v1687
  %v1689 = vmul.f32 %v1603, 1.442695
  %v1690 = vpow.pop %v1689
  %v1691 = vmul.f32 %v1604, 1.442695
  %v1692 = vpow.pop %v1691
  %v1693 = vmul.f32 %v1605, 1.442695
  %v1694 = vpow.pop %v1693
  %v1695 = vmul.f32 %v1606, 1.442695
  %v1696 = vpow.pop %v1695
  %v1697 = vmul.f32 %v1607, 1.442695
  %v1698 = vpow.pop %v1697
  %v1699 = vmul.f32 %v1608, 1.442695
  %v1700 = vpow.pop %v1699
  %v1701 = vmul.f32 %v1609, 1.442695
  %v1702 = vpow.pop %v1701
  %v1703 = vmul.f32 %v1610, 1.442695
  %v1704 = vpow.pop %v1703
  %v1705 = vmul.f32 %v1611, 1.442695
  %v1706 = vpow.pop %v1705
  %v1707 = vmul.f32 %v1612, 1.442695
  %v1708 = vpow.pop %v1707
  %v1709 = vmul.f32 %v1613, 1.442695
  %v1710 = vpow.pop %v1709
  %v1711 = vmul.f32 %v1614, 1.442695
  %v1712 = vpow.pop %v1711
  %v1713 = vmul.f32 %v1615, 1.442695
  %v1714 = vpow.pop %v1713
  %v1715 = vmul.f32 %v1616, 1.442695
  %v1716 = vpow.pop %v1715
  %v1717 = vmul.f32 %v1617, 1.442695
  %v1718 = vpow.pop %v1717
  %v1719 = vmul.f32 %v1618, 1.442695
  %v1720 = vpow.pop %v1719
  %v1721 = vmul.f32 %v1619, 1.442695
  %v1722 = vpow.pop %v1721
  %v1723 = vmul.f32 %v1620, 1.442695
  %v1724 = vpow.pop %v1723
  %v1725 = vmul.f32 %v1621, 1.442695
  %v1726 = vpow.pop %v1725
  %v1727 = vmul.f32 %v1622, 1.442695
  %v1728 = vpow.pop %v1727
  %v1729 = vmul.f32 %v1623, 1.442695
  %v1730 = vpow.pop %v1729
  %v1731 = vmul.f32 %v1624, 1.442695
  %v1732 = vpow.pop %v1731
  %v1733 = vmul.f32 %v1625, 1.442695
  %v1734 = vpow.pop %v1733
  %v1735 = vmul.f32 %v1626, 1.442695
  %v1736 = vpow.pop %v1735
  %v1737 = vmul.f32 %v1627, 1.442695
  %v1738 = vpow.pop %v1737
  %v1739 = vmul.f32 %v1628, 1.442695
  %v1740 = vpow.pop %v1739
  %v1741 = vmul.f32 %v1629, 1.442695
  %v1742 = vpow.pop %v1741
  %v1743 = vmul.f32 %v1630, 1.442695
  %v1744 = vpow.pop %v1743
  %v1745 = vmul.f32 %v1631, 1.442695
  %v1746 = vpow.pop %v1745
  %v1747 = vmul.f32 %v1632, 1.442695
  %v1748 = vpow.pop %v1747
  %v1749 = vmul.f32 %v1633, 1.442695
  %v1750 = vpow.pop %v1749
  %v1751 = vmul.f32 %v1634, 1.442695
  %v1752 = vpow.pop %v1751
  %v1753 = vmul.f32 %v1635, 1.442695
  %v1754 = vpow.pop %v1753
  %v1755 = vmul.f32 %v1636, 1.442695
  %v1756 = vpow.pop %v1755
  %v1757 = vmul.f32 %v1637, 1.442695
  %v1758 = vpow.pop %v1757
  %v1759 = vmul.f32 %v1638, 1.442695
  %v1760 = vpow.pop %v1759
  %v1761 = vmul.f32 %v1639, 1.442695
  %v1762 = vpow.pop %v1761
  %v1763 = vmul.f32 %v1640, 1.442695
  %v1764 = vpow.pop %v1763
  %v1765 = vmul.f32 %v1641, 1.442695
  %v1766 = vpow.pop %v1765
  %v1767 = vmul.f32 %v1642, 1.442695
  %v1768 = vpow.pop %v1767
  %v1769 = vmul.f32 %v1643, 1.442695
  %v1770 = vpow.pop %v1769
  %v1771 = vmul.f32 %v1644, 1.442695
  %v1772 = vpow.pop %v1771
  %v1773 = vadd.f32 %v1646, 1.0
  %v1774 = vadd.f32 %v1648, 1.0
  %v1775 = vadd.f32 %v1650, 1.0
  %v1776 = vadd.f32 %v1652, 1.0
  %v1777 = vadd.f32 %v1654, 1.0
  %v1778 = vadd.f32 %v1656, 1.0
  %v1779 = vadd.f32 %v1658, 1.0
  %v1780 = vadd.f32 %v1660, 1.0
  %v1781 = vadd.f32 %v1662, 1.0
  %v1782 = vadd.f32 %v1664, 1.0
  %v1783 = vadd.f32 %v1666, 1.0
  %v1784 = vadd.f32 %v1668, 1.0
  %v1785 = vadd.f32 %v1670, 1.0
  %v1786 = vadd.f32 %v1672, 1.0
  %v1787 = vadd.f32 %v1674, 1.0
  %v1788 = vadd.f32 %v1676, 1.0
  %v1789 = vadd.f32 %v1678, 1.0
  %v1790 = vadd.f32 %v1680, 1.0
  %v1791 = vadd.f32 %v1682, 1.0
  %v1792 = vadd.f32 %v1684, 1.0
  %v1793 = vadd.f32 %v1686, 1.0
  %v1794 = vadd.f32 %v1688, 1.0
  %v1795 = vadd.f32 %v1690, 1.0
  %v1796 = vadd.f32 %v1692, 1.0
  %v1797 = vadd.f32 %v1694, 1.0
  %v1798 = vadd.f32 %v1696, 1.0
  %v1799 = vadd.f32 %v1698, 1.0
  %v1800 = vadd.f32 %v1700, 1.0
  %v1801 = vadd.f32 %v1702, 1.0
  %v1802 = vadd.f32 %v1704, 1.0
  %v1803 = vadd.f32 %v1706, 1.0
  %v1804 = vadd.f32 %v1708, 1.0
  %v1805 = vadd.f32 %v1710, 1.0
  %v1806 = vadd.f32 %v1712, 1.0
  %v1807 = vadd.f32 %v1714, 1.0
  %v1808 = vadd.f32 %v1716, 1.0
  %v1809 = vadd.f32 %v1718, 1.0
  %v1810 = vadd.f32 %v1720, 1.0
  %v1811 = vadd.f32 %v1722, 1.0
  %v1812 = vadd.f32 %v1724, 1.0
  %v1813 = vadd.f32 %v1726, 1.0
  %v1814 = vadd.f32 %v1728, 1.0
  %v1815 = vadd.f32 %v1730, 1.0
  %v1816 = vadd.f32 %v1732, 1.0
  %v1817 = vadd.f32 %v1734, 1.0
  %v1818 = vadd.f32 %v1736, 1.0
  %v1819 = vadd.f32 %v1738, 1.0
  %v1820 = vadd.f32 %v1740, 1.0
  %v1821 = vadd.f32 %v1742, 1.0
  %v1822 = vadd.f32 %v1744, 1.0
  %v1823 = vadd.f32 %v1746, 1.0
  %v1824 = vadd.f32 %v1748, 1.0
  %v1825 = vadd.f32 %v1750, 1.0
  %v1826 = vadd.f32 %v1752, 1.0
  %v1827 = vadd.f32 %v1754, 1.0
  %v1828 = vadd.f32 %v1756, 1.0
  %v1829 = vadd.f32 %v1758, 1.0
  %v1830 = vadd.f32 %v1760, 1.0
  %v1831 = vadd.f32 %v1762, 1.0
  %v1832 = vadd.f32 %v1764, 1.0
  %v1833 = vadd.f32 %v1766, 1.0
  %v1834 = vadd.f32 %v1768, 1.0
  %v1835 = vadd.f32 %v1770, 1.0
  %v1836 = vadd.f32 %v1772, 1.0
  %v1837 = vrcp.pop %v1773
  %v1838 = vrcp.pop %v1774
  %v1839 = vrcp.pop %v1775
  %v1840 = vrcp.pop %v1776
  %v1841 = vrcp.pop %v1777
  %v1842 = vrcp.pop %v1778
  %v1843 = vrcp.pop %v1779
  %v1844 = vrcp.pop %v1780
  %v1845 = vrcp.pop %v1781
  %v1846 = vrcp.pop %v1782
  %v1847 = vrcp.pop %v1783
  %v1848 = vrcp.pop %v1784
  %v1849 = vrcp.pop %v1785
  %v1850 = vrcp.pop %v1786
  %v1851 = vrcp.pop %v1787
  %v1852 = vrcp.pop %v1788
  %v1853 = vrcp.pop %v1789
  %v1854 = vrcp.pop %v1790
  %v1855 = vrcp.pop %v1791
  %v1856 = vrcp.pop %v1792
  %v1857 = vrcp.pop %v1793
  %v1858 = vrcp.pop %v1794
  %v1859 = vrcp.pop %v1795
  %v1860 = vrcp.pop %v1796
  %v1861 = vrcp.pop %v1797
  %v1862 = vrcp.pop %v1798
  %v1863 = vrcp.pop %v1799
  %v1864 = vrcp.pop %v1800
  %v1865 = vrcp.pop %v1801
  %v1866 = vrcp.pop %v1802
  %v1867 = vrcp.pop %v1803
  %v1868 = vrcp.pop %v1804
  %v1869 = vrcp.pop %v1805
  %v1870 = vrcp.pop %v1806
  %v1871 = vrcp.pop %v1807
  %v1872 = vrcp.pop %v1808
  %v1873 = vrcp.pop %v1809
  %v1874 = vrcp.pop %v1810
  %v1875 = vrcp.pop %v1811
  %v1876 = vrcp.pop %v1812
  %v1877 = vrcp.pop %v1813
  %v1878 = vrcp.pop %v1814
  %v1879 = vrcp.pop %v1815
  %v1880 = vrcp.pop %v1816
  %v1881 = vrcp.pop %v1817
  %v1882 = vrcp.pop %v1818
  %v1883 = vrcp.pop %v1819
  %v1884 = vrcp.pop %v1820
  %v1885 = vrcp.pop %v1821
  %v1886 = vrcp.pop %v1822
  %v1887 = vrcp.pop %v1823
  %v1888 = vrcp.pop %v1824
  %v1889 = vrcp.pop %v1825
  %v1890 = vrcp.pop %v1826
  %v1891 = vrcp.pop %v1827
  %v1892 = vrcp.pop %v1828
  %v1893 = vrcp.pop %v1829
  %v1894 = vrcp.pop %v1830
  %v1895 = vrcp.pop %v1831
  %v1896 = vrcp.pop %v1832
  %v1897 = vrcp.pop %v1833
  %v1898 = vrcp.pop %v1834
  %v1899 = vrcp.pop %v1835
  %v1900 = vrcp.pop %v1836
  %vm1901 = vcmask 7168
  %1902 = vst.msk [vmem:[%s7] sm:$0xff] %vm1901, %v1837
  %1903 = vst.msk [vmem:[%s7 + $0x8] sm:$0xff] %vm1901, %v1838
  %1904 = vst.msk [vmem:[%s7 + $0x10] sm:$0xff] %vm1901, %v1839
  %1905 = vst.msk [vmem:[%s7 + $0x18] sm:$0xff] %vm1901, %v1840
  %1906 = vst.msk [vmem:[%s7 + $0x20] sm:$0xff] %vm1901, %v1841
  %1907 = vst.msk [vmem:[%s7 + $0x28] sm:$0xff] %vm1901, %v1842
  %1908 = vst.msk [vmem:[%s7 + $0x30] sm:$0xff] %vm1901, %v1843
  %1909 = vst.msk [vmem:[%s7 + $0x38] sm:$0xff] %vm1901, %v1844
  %1910 = vst.msk [vmem:[%s7 + $0x40] sm:$0xff] %vm1901, %v1845
  %1911 = vst.msk [vmem:[%s7 + $0x48] sm:$0xff] %vm1901, %v1846
  %1912 = vst.msk [vmem:[%s7 + $0x50] sm:$0xff] %vm1901, %v1847
  %1913 = vst.msk [vmem:[%s7 + $0x58] sm:$0xff] %vm1901, %v1848
  %1914 = vst.msk [vmem:[%s7 + $0x60] sm:$0xff] %vm1901, %v1849
  %1915 = vst.msk [vmem:[%s7 + $0x68] sm:$0xff] %vm1901, %v1850
  %1916 = vst.msk [vmem:[%s7 + $0x70] sm:$0xff] %vm1901, %v1851
  %1917 = vst.msk [vmem:[%s7 + $0x78] sm:$0xff] %vm1901, %v1852
  %1918 = vst.msk [vmem:[%s7 + $0x80] sm:$0xff] %vm1901, %v1853
  %1919 = vst.msk [vmem:[%s7 + $0x88] sm:$0xff] %vm1901, %v1854
  %1920 = vst.msk [vmem:[%s7 + $0x90] sm:$0xff] %vm1901, %v1855
  %1921 = vst.msk [vmem:[%s7 + $0x98] sm:$0xff] %vm1901, %v1856
  %1922 = vst.msk [vmem:[%s7 + $0xa0] sm:$0xff] %vm1901, %v1857
  %1923 = vst.msk [vmem:[%s7 + $0xa8] sm:$0xff] %vm1901, %v1858
  %1924 = vst.msk [vmem:[%s7 + $0xb0] sm:$0xff] %vm1901, %v1859
  %1925 = vst.msk [vmem:[%s7 + $0xb8] sm:$0xff] %vm1901, %v1860
  %1926 = vst.msk [vmem:[%s7 + $0xc0] sm:$0xff] %vm1901, %v1861
  %1927 = vst.msk [vmem:[%s7 + $0xc8] sm:$0xff] %vm1901, %v1862
  %1928 = vst.msk [vmem:[%s7 + $0xd0] sm:$0xff] %vm1901, %v1863
  %1929 = vst.msk [vmem:[%s7 + $0xd8] sm:$0xff] %vm1901, %v1864
  %1930 = vst.msk [vmem:[%s7 + $0xe0] sm:$0xff] %vm1901, %v1865
  %1931 = vst.msk [vmem:[%s7 + $0xe8] sm:$0xff] %vm1901, %v1866
  %1932 = vst.msk [vmem:[%s7 + $0xf0] sm:$0xff] %vm1901, %v1867
  %1933 = vst.msk [vmem:[%s7 + $0xf8] sm:$0xff] %vm1901, %v1868
  %1934 = vst.msk [vmem:[%s7 + $0x100] sm:$0xff] %vm1901, %v1869
  %1935 = vst.msk [vmem:[%s7 + $0x108] sm:$0xff] %vm1901, %v1870
  %1936 = vst.msk [vmem:[%s7 + $0x110] sm:$0xff] %vm1901, %v1871
  %1937 = vst.msk [vmem:[%s7 + $0x118] sm:$0xff] %vm1901, %v1872
  %1938 = vst.msk [vmem:[%s7 + $0x120] sm:$0xff] %vm1901, %v1873
  %1939 = vst.msk [vmem:[%s7 + $0x128] sm:$0xff] %vm1901, %v1874
  %1940 = vst.msk [vmem:[%s7 + $0x130] sm:$0xff] %vm1901, %v1875
  %1941 = vst.msk [vmem:[%s7 + $0x138] sm:$0xff] %vm1901, %v1876
  %1942 = vst.msk [vmem:[%s7 + $0x140] sm:$0xff] %vm1901, %v1877
  %1943 = vst.msk [vmem:[%s7 + $0x148] sm:$0xff] %vm1901, %v1878
  %1944 = vst.msk [vmem:[%s7 + $0x150] sm:$0xff] %vm1901, %v1879
  %1945 = vst.msk [vmem:[%s7 + $0x158] sm:$0xff] %vm1901, %v1880
  %1946 = vst.msk [vmem:[%s7 + $0x160] sm:$0xff] %vm1901, %v1881
  %1947 = vst.msk [vmem:[%s7 + $0x168] sm:$0xff] %vm1901, %v1882
  %1948 = vst.msk [vmem:[%s7 + $0x170] sm:$0xff] %vm1901, %v1883
  %1949 = vst.msk [vmem:[%s7 + $0x178] sm:$0xff] %vm1901, %v1884
  %1950 = vst.msk [vmem:[%s7 + $0x180] sm:$0xff] %vm1901, %v1885
  %1951 = vst.msk [vmem:[%s7 + $0x188] sm:$0xff] %vm1901, %v1886
  %1952 = vst.msk [vmem:[%s7 + $0x190] sm:$0xff] %vm1901, %v1887
  %1953 = vst.msk [vmem:[%s7 + $0x198] sm:$0xff] %vm1901, %v1888
  %1954 = vst.msk [vmem:[%s7 + $0x1a0] sm:$0xff] %vm1901, %v1889
  %1955 = vst.msk [vmem:[%s7 + $0x1a8] sm:$0xff] %vm1901, %v1890
  %1956 = vst.msk [vmem:[%s7 + $0x1b0] sm:$0xff] %vm1901, %v1891
  %1957 = vst.msk [vmem:[%s7 + $0x1b8] sm:$0xff] %vm1901, %v1892
  %1958 = vst.msk [vmem:[%s7 + $0x1c0] sm:$0xff] %vm1901, %v1893
  %1959 = vst.msk [vmem:[%s7 + $0x1c8] sm:$0xff] %vm1901, %v1894
  %1960 = vst.msk [vmem:[%s7 + $0x1d0] sm:$0xff] %vm1901, %v1895
  %1961 = vst.msk [vmem:[%s7 + $0x1d8] sm:$0xff] %vm1901, %v1896
  %1962 = vst.msk [vmem:[%s7 + $0x1e0] sm:$0xff] %vm1901, %v1897
  %1963 = vst.msk [vmem:[%s7 + $0x1e8] sm:$0xff] %vm1901, %v1898
  %1964 = vst.msk [vmem:[%s7 + $0x1f0] sm:$0xff] %vm1901, %v1899
  %1965 = vst.msk [vmem:[%s7 + $0x1f8] sm:$0xff] %vm1901, %v1900
  // Predicated region
  $region30: #{tpu_custom_call.1} parent=0 // pred_check
    _
  $region31: #{tpu_custom_call.1} parent=0 // pred_check_branch
    %1967 = sbr.rel (0) target = $region33
  $region32: #{tpu_custom_call.1} parent=0 // pred_region
    _
  $region33: #{tpu_custom_call.1} parent=0 // pred_fallthru
    _
  // Predicated region
  $region34: #{tpu_custom_call.1} parent=0 // pred_check
    _
  $region35: #{tpu_custom_call.1} parent=0 // pred_check_branch
    %1969 = sbr.rel (0) target = $region37
  $region36: #{tpu_custom_call.1} parent=0 // pred_region
    _
  $region37: #{tpu_custom_call.1} parent=0 // pred_fallthru
    _

</llo_original>
